<compile_context>
chip_gen: v7x
topology: tpu7x:2x2x1
jax: 0.10.0
libtpu: 0.0.40
codegen_flags: <defaults>
</compile_context>

<pallas_src>
import functools

import jax
import jax.numpy as jnp
from jax import lax
from jax.experimental import pallas as pl
from jax.experimental.pallas import tpu as pltpu


def _round_up(x, m):
    return (x + m - 1) // m * m


def _pick_tile(m, tm_target):
    """Row tile: multiple of 16 (bf16 sublane packing); even number of grid steps
    whenever there is more than one step (keeps both v7x TensorCores busy)."""
    tm = max(16, min(_round_up(tm_target, 16), _round_up(m, 16)))
    steps = -(-m // tm)
    if steps == 1 and m > 16:
        tm = max(16, _round_up(-(-m // 2), 16))
        steps = -(-m // tm)
    if steps > 1 and steps % 2 == 1:
        steps += 1
    return tm, steps * tm, steps


def downsample_kernel(patches_ref, w_ref, shift_ref, mask_ref, conv_ref, pool_ref,
                      *, cin, cin_pad):
    # patches_ref: (tm, 9*Cin)       bf16  im2col rows, shared by conv and pool branches
    # w_ref:       (9*Cin, Cout_pad) bf16  conv weight, BN scale folded, zero-padded cols
    # shift_ref:   (1, Cout_pad)     f32   folded BN shift = beta + (bias - mean)*scale
    # mask_ref:    (tm, 1)           i32   bit k set  <=>  pool tap k lies inside the image
    # conv_ref:    (tm, Cout_pad)    f32   ReLU(conv*scale + shift)       (lane-dense)
    # pool_ref:    (tm, Cin_pad)     f32   [maxpool(Cin) | zero pad]      (lane-dense)
    p = patches_ref[...]                                      # (tm, 9*Cin) bf16

    # ---- conv branch: MXU matmul, f32 accumulation, shift + ReLU, full-width store ----
    y = jnp.dot(p, w_ref[...], preferred_element_type=jnp.float32)
    conv_ref[...] = jnp.maximum(y + shift_ref[...], 0.0)

    # ---- pool branch: bf16 VPU max over the 9 taps of the shared patch buffer ----
    # Center tap (ky=1, kx=1 -> k=4) is always in-bounds for k3/s2/p1, so it seeds the max;
    # only the remaining 8 taps need the border-validity mask.
    bits = mask_ref[...]                                      # (tm, 1) int32
    neg = jnp.asarray(-jnp.inf, dtype=p.dtype)
    pooled = p[:, 4 * cin:5 * cin]                            # bf16 (tm, Cin)
    for k in (0, 1, 2, 3, 5, 6, 7, 8):
        tap = p[:, k * cin:(k + 1) * cin]                     # static lane slice, bf16
        ok = ((bits >> k) & 1) > 0                            # (tm, 1), broadcasts over Cin
        pooled = jnp.maximum(pooled, jnp.where(ok, tap, neg))
    pooled = pooled.astype(jnp.float32)
    if cin_pad > cin:                                         # lane-pad -> full unmasked store
        pooled = jnp.concatenate(
            [pooled, jnp.zeros((pooled.shape[0], cin_pad - cin), jnp.float32)], axis=1)
    pool_ref[...] = pooled


def downsample_module(x_nchw, w_oihw, conv_bias, gamma, beta, run_mean, run_var,
                      *, eps=1e-5, tm=256):
    N, Cin, H, W = x_nchw.shape
    Cout = w_oihw.shape[0]
    Ho = (H + 2 - 3) // 2 + 1
    Wo = (W + 2 - 3) // 2 + 1
    M = N * Ho * Wo
    K = 9 * Cin
    Cout_pad = _round_up(Cout, 128)                 # lane-dense conv output width
    Cin_pad = _round_up(Cin, 128)                   # lane-dense pool output width

    tm, M_pad, steps = _pick_tile(M, tm)

    # ---- glue: NCHW -> NHWC (bf16 BEFORE pad/stack), zero pad, im2col (single buffer) ----
    x = jnp.transpose(x_nchw, (0, 2, 3, 1)).astype(jnp.bfloat16)       # (N,H,W,Cin) bf16
    xp = jnp.pad(x, ((0, 0), (1, 1), (1, 1), (0, 0)))                  # zero pad
    taps = [xp[:, ky:ky + 2 * Ho:2, kx:kx + 2 * Wo:2, :]
            for ky in range(3) for kx in range(3)]
    patches = jnp.stack(taps, axis=3).reshape(M, K)                    # (M, 9*Cin) bf16
    patches = jnp.pad(patches, ((0, M_pad - M), (0, 0)))
    # TODO(synk): replace this wrapper im2col with an in-kernel halo-slab DMA
    #             (memory_space=pl.ANY + pl.ds(..., stride=2)) to remove the ~9x HBM read
    #             amplification of x for realistic Inception-sized inputs.

    # ---- per-output-pixel tap-validity bits (maxpool must ignore zero-padded border taps) ----
    yy = 2 * jnp.arange(Ho)[:, None] + jnp.arange(3)[None, :] - 1      # (Ho, 3)
    xx = 2 * jnp.arange(Wo)[:, None] + jnp.arange(3)[None, :] - 1      # (Wo, 3)
    row_ok = (yy >= 0) & (yy < H)
    col_ok = (xx >= 0) & (xx < W)
    valid = (row_ok[:, None, :, None] & col_ok[None, :, None, :]).reshape(Ho * Wo, 9)
    bits_hw = jnp.sum(valid.astype(jnp.int32) << jnp.arange(9, dtype=jnp.int32)[None, :],
                      axis=1)                                          # (Ho*Wo,)
    mask_bits = jnp.tile(bits_hw, N).reshape(M, 1)
    mask_bits = jnp.pad(mask_bits, ((0, M_pad - M), (0, 0)))           # padded rows: no taps

    # ---- conv weight (Cout,Cin,kh,kw) -> (9*Cin, Cout_pad) with BN scale folded in ----
    scale = gamma / jnp.sqrt(run_var + eps)
    shift = beta + (conv_bias - run_mean) * scale
    w_mat = jnp.transpose(w_oihw, (2, 3, 1, 0)).reshape(K, Cout) * scale[None, :]
    w_mat = jnp.pad(w_mat, ((0, 0), (0, Cout_pad - Cout))).astype(jnp.bfloat16)
    shift2d = jnp.pad(shift.reshape(1, Cout),
                      ((0, 0), (0, Cout_pad - Cout))).astype(jnp.float32)

    # VMEM budget: double-buffered patches/mask/outputs + (possibly double-buffered) weight.
    vmem_need = (2 * tm * K * 2 + 2 * K * Cout_pad * 2 + 2 * tm * 4 + 2 * Cout_pad * 4
                 + 2 * tm * Cout_pad * 4 + 2 * tm * Cin_pad * 4)
    vmem_limit = int(min(64 * 2**20, max(32 * 2**20, vmem_need + (2 << 20))))
    # (64 MiB cap = v7x physical VMEM; on v5e/v6e this may be raised toward 128 MiB when
    #  growing tm to 512-1024 for realistic Inception shapes.)

    conv_flat, pool_flat = pl.pallas_call(
        functools.partial(downsample_kernel, cin=Cin, cin_pad=Cin_pad),
        out_shape=(jax.ShapeDtypeStruct((M_pad, Cout_pad), jnp.float32),
                   jax.ShapeDtypeStruct((M_pad, Cin_pad), jnp.float32)),
        grid_spec=pltpu.PrefetchScalarGridSpec(
            num_scalar_prefetch=0,
            grid=(steps,),
            in_specs=[
                pl.BlockSpec((tm, K), lambda i: (i, 0)),
                # Constant-index weight block; for very large K*Cout consider
                # pipeline_mode=pl.Buffered(1) or a one-shot DMA into VMEM scratch (v7x).
                pl.BlockSpec((K, Cout_pad), lambda i: (0, 0)),
                pl.BlockSpec((1, Cout_pad), lambda i: (0, 0)),
                pl.BlockSpec((tm, 1), lambda i: (i, 0)),
            ],
            out_specs=[
                pl.BlockSpec((tm, Cout_pad), lambda i: (i, 0)),
                pl.BlockSpec((tm, Cin_pad), lambda i: (i, 0)),
            ],
        ),
        compiler_params=pltpu.CompilerParams(
            dimension_semantics=("parallel",),
            vmem_limit_bytes=vmem_limit,
        ),
    )(patches, w_mat, shift2d, mask_bits)

    # back to NCHW: slice off row/channel padding, reshape, concat branches, transpose
    conv = conv_flat[:M, :Cout].reshape(N, Ho, Wo, Cout)
    pool = pool_flat[:M, :Cin].reshape(N, Ho, Wo, Cin)
    out = jnp.concatenate([conv, pool], axis=-1)
    return jnp.transpose(out, (0, 3, 1, 2))


def _reference(x, w, b, gamma, beta, mean, var, eps=1e-5):
    conv = lax.conv_general_dilated(
        x, w, window_strides=(2, 2), padding=((1, 1), (1, 1)),
        dimension_numbers=("NCHW", "OIHW", "NCHW")) + b[None, :, None, None]
    bn = (conv - mean[None, :, None, None]) / jnp.sqrt(var + eps)[None, :, None, None]
    bn = bn * gamma[None, :, None, None] + beta[None, :, None, None]
    branch3x3 = jnp.maximum(bn, 0.0)
    branch_pool = lax.reduce_window(
        x, -jnp.inf, lax.max, (1, 1, 3, 3), (1, 1, 2, 2),
        padding=((0, 0), (0, 0), (1, 1), (1, 1)))
    return jnp.concatenate([branch3x3, branch_pool], axis=1)


if __name__ == "__main__":
    key = jax.random.PRNGKey(0)
    N, Cin, H, W = 2, 4, 16, 16
    Cout = 8

    k0, k1, k2, k3, k4, k5, k6 = jax.random.split(key, 7)
    x = jax.random.normal(k0, (N, Cin, H, W), dtype=jnp.float32)
    w = jax.random.normal(k1, (Cout, Cin, 3, 3), dtype=jnp.float32) * 0.1
    b = jax.random.normal(k2, (Cout,), dtype=jnp.float32) * 0.1
    gamma = 1.0 + 0.1 * jax.random.normal(k3, (Cout,), dtype=jnp.float32)
    beta = 0.1 * jax.random.normal(k4, (Cout,), dtype=jnp.float32)
    run_mean = 0.1 * jax.random.normal(k5, (Cout,), dtype=jnp.float32)
    run_var = jnp.abs(jax.random.normal(k6, (Cout,), dtype=jnp.float32)) + 0.5

    # Auto tiling: for this tiny test _pick_tile yields tm=64 with a 2-step grid
    # (even step count -> both v7x TensorCores busy); default target tm=256 is for
    # realistic Inception-sized inputs.
    out = downsample_module(x, w, b, gamma, beta, run_mean, run_var)
    out = jax.block_until_ready(out)

    ref = _reference(x, w, b, gamma, beta, run_mean, run_var)
    assert out.shape == (N, Cout + Cin, H // 2, W // 2), out.shape
    # tolerance loosened because patches/weights are fed to the MXU (and the pool max
    # operates on the shared patch buffer) in bfloat16
    assert jnp.allclose(out, ref, atol=5e-2, rtol=5e-2), float(jnp.max(jnp.abs(out - ref)))

    print("KERNEL_OK")
</pallas_src>

<mosaic_0001>
module attributes {stable_mosaic.version = 11 : i64} {
  func.func @downsample_kernel(%arg0: i32, %arg1: memref<64x36xbf16, #tpu.memory_space<vmem>>, %arg2: memref<36x128xbf16, #tpu.memory_space<vmem>>, %arg3: memref<1x128xf32, #tpu.memory_space<vmem>>, %arg4: memref<64x1xi32, #tpu.memory_space<vmem>>, %arg5: memref<64x128xf32, #tpu.memory_space<vmem>>, %arg6: memref<64x128xf32, #tpu.memory_space<vmem>>) attributes {dimension_semantics = [#tpu.dimension_semantics<parallel>], iteration_bounds = array<i64: 2>, scalar_prefetch = 0 : i64, scratch_operands = 0 : i64, tpu.core_type = #tpu.core_type<tc>, window_params = [{transform_indices = @transform_0, window_bounds = array<i64: 64, 36>}, {pipeline_mode = #tpu.pipeline_mode<synchronous>, transform_indices = @transform_1, window_bounds = array<i64: 36, 128>}, {pipeline_mode = #tpu.pipeline_mode<synchronous>, transform_indices = @transform_2, window_bounds = array<i64: 1, 128>}, {transform_indices = @transform_3, window_bounds = array<i64: 64, 1>}, {transform_indices = @transform_4, window_bounds = array<i64: 64, 128>}, {transform_indices = @transform_5, window_bounds = array<i64: 64, 128>}]} {
    %c0 = arith.constant 0 : index
    %c0_0 = arith.constant 0 : index
    %0 = vector.load %arg1[%c0, %c0_0] : memref<64x36xbf16, #tpu.memory_space<vmem>>, vector<64x36xbf16>
    %c0_1 = arith.constant 0 : index
    %c0_2 = arith.constant 0 : index
    %1 = vector.load %arg2[%c0_1, %c0_2] : memref<36x128xbf16, #tpu.memory_space<vmem>>, vector<36x128xbf16>
    %cst = arith.constant dense<0.000000e+00> : vector<64x128xf32>
    %2 = tpu.matmul %0, %1, %cst {dimension_numbers = #tpu.dot_dimension_numbers<[1], [0], [0], [1], [0, 0, 1, 1], [], []>} : vector<64x36xbf16>, vector<36x128xbf16>, vector<64x128xf32> -> vector<64x128xf32>
    %c0_3 = arith.constant 0 : index
    %c0_4 = arith.constant 0 : index
    %3 = vector.load %arg3[%c0_3, %c0_4] : memref<1x128xf32, #tpu.memory_space<vmem>>, vector<1x128xf32>
    %4 = vector.broadcast %3 : vector<1x128xf32> to vector<64x128xf32>
    %5 = arith.addf %2, %4 : vector<64x128xf32>
    %cst_5 = arith.constant 0.000000e+00 : f32
    %6 = vector.broadcast %cst_5 : f32 to vector<64x128xf32>
    %7 = arith.maximumf %5, %6 : vector<64x128xf32>
    %c0_6 = arith.constant 0 : index
    %c0_7 = arith.constant 0 : index
    %8 = vector.load %arg5[%c0_6, %c0_7] : memref<64x128xf32, #tpu.memory_space<vmem>>, vector<64x128xf32>
    tpu.vector_store %arg5[%c0_6, %c0_7], %7 {strides = array<i32>} : memref<64x128xf32, #tpu.memory_space<vmem>>, vector<64x128xf32>,
    %c0_8 = arith.constant 0 : index
    %c0_9 = arith.constant 0 : index
    %9 = vector.load %arg4[%c0_8, %c0_9] : memref<64x1xi32, #tpu.memory_space<vmem>>, vector<64x1xi32>
    %10 = vector.extract_strided_slice %0 {offsets = [0, 16], sizes = [64, 4], strides = [1, 1]} : vector<64x36xbf16> to vector<64x4xbf16>
    %11 = vector.extract_strided_slice %0 {offsets = [0, 0], sizes = [64, 4], strides = [1, 1]} : vector<64x36xbf16> to vector<64x4xbf16>
    %c0_i32 = arith.constant 0 : i32
    %12 = vector.broadcast %c0_i32 : i32 to vector<64x1xi32>
    %13 = arith.shrsi %9, %12 : vector<64x1xi32>
    %c1_i32 = arith.constant 1 : i32
    %14 = vector.broadcast %c1_i32 : i32 to vector<64x1xi32>
    %15 = arith.andi %13, %14 : vector<64x1xi32>
    %c0_i32_10 = arith.constant 0 : i32
    %16 = vector.broadcast %c0_i32_10 : i32 to vector<64x1xi32>
    %17 = arith.cmpi sgt, %15, %16 : vector<64x1xi32>
    %cst_11 = arith.constant 0xFF80 : bf16
    %18 = vector.shape_cast %17 : vector<64x1xi1> to vector<64x1xi1>
    %19 = vector.broadcast %18 : vector<64x1xi1> to vector<64x4xi1>
    %20 = vector.broadcast %cst_11 : bf16 to vector<64x4xbf16>
    %21 = arith.select %19, %11, %20 : vector<64x4xi1>, vector<64x4xbf16>
    %22 = arith.maximumf %10, %21 : vector<64x4xbf16>
    %23 = vector.extract_strided_slice %0 {offsets = [0, 4], sizes = [64, 4], strides = [1, 1]} : vector<64x36xbf16> to vector<64x4xbf16>
    %c1_i32_12 = arith.constant 1 : i32
    %24 = vector.broadcast %c1_i32_12 : i32 to vector<64x1xi32>
    %25 = arith.shrsi %9, %24 : vector<64x1xi32>
    %c1_i32_13 = arith.constant 1 : i32
    %26 = vector.broadcast %c1_i32_13 : i32 to vector<64x1xi32>
    %27 = arith.andi %25, %26 : vector<64x1xi32>
    %c0_i32_14 = arith.constant 0 : i32
    %28 = vector.broadcast %c0_i32_14 : i32 to vector<64x1xi32>
    %29 = arith.cmpi sgt, %27, %28 : vector<64x1xi32>
    %cst_15 = arith.constant 0xFF80 : bf16
    %30 = vector.shape_cast %29 : vector<64x1xi1> to vector<64x1xi1>
    %31 = vector.broadcast %30 : vector<64x1xi1> to vector<64x4xi1>
    %32 = vector.broadcast %cst_15 : bf16 to vector<64x4xbf16>
    %33 = arith.select %31, %23, %32 : vector<64x4xi1>, vector<64x4xbf16>
    %34 = arith.maximumf %22, %33 : vector<64x4xbf16>
    %35 = vector.extract_strided_slice %0 {offsets = [0, 8], sizes = [64, 4], strides = [1, 1]} : vector<64x36xbf16> to vector<64x4xbf16>
    %c2_i32 = arith.constant 2 : i32
    %36 = vector.broadcast %c2_i32 : i32 to vector<64x1xi32>
    %37 = arith.shrsi %9, %36 : vector<64x1xi32>
    %c1_i32_16 = arith.constant 1 : i32
    %38 = vector.broadcast %c1_i32_16 : i32 to vector<64x1xi32>
    %39 = arith.andi %37, %38 : vector<64x1xi32>
    %c0_i32_17 = arith.constant 0 : i32
    %40 = vector.broadcast %c0_i32_17 : i32 to vector<64x1xi32>
    %41 = arith.cmpi sgt, %39, %40 : vector<64x1xi32>
    %cst_18 = arith.constant 0xFF80 : bf16
    %42 = vector.shape_cast %41 : vector<64x1xi1> to vector<64x1xi1>
    %43 = vector.broadcast %42 : vector<64x1xi1> to vector<64x4xi1>
    %44 = vector.broadcast %cst_18 : bf16 to vector<64x4xbf16>
    %45 = arith.select %43, %35, %44 : vector<64x4xi1>, vector<64x4xbf16>
    %46 = arith.maximumf %34, %45 : vector<64x4xbf16>
    %47 = vector.extract_strided_slice %0 {offsets = [0, 12], sizes = [64, 4], strides = [1, 1]} : vector<64x36xbf16> to vector<64x4xbf16>
    %c3_i32 = arith.constant 3 : i32
    %48 = vector.broadcast %c3_i32 : i32 to vector<64x1xi32>
    %49 = arith.shrsi %9, %48 : vector<64x1xi32>
    %c1_i32_19 = arith.constant 1 : i32
    %50 = vector.broadcast %c1_i32_19 : i32 to vector<64x1xi32>
    %51 = arith.andi %49, %50 : vector<64x1xi32>
    %c0_i32_20 = arith.constant 0 : i32
    %52 = vector.broadcast %c0_i32_20 : i32 to vector<64x1xi32>
    %53 = arith.cmpi sgt, %51, %52 : vector<64x1xi32>
    %cst_21 = arith.constant 0xFF80 : bf16
    %54 = vector.shape_cast %53 : vector<64x1xi1> to vector<64x1xi1>
    %55 = vector.broadcast %54 : vector<64x1xi1> to vector<64x4xi1>
    %56 = vector.broadcast %cst_21 : bf16 to vector<64x4xbf16>
    %57 = arith.select %55, %47, %56 : vector<64x4xi1>, vector<64x4xbf16>
    %58 = arith.maximumf %46, %57 : vector<64x4xbf16>
    %59 = vector.extract_strided_slice %0 {offsets = [0, 20], sizes = [64, 4], strides = [1, 1]} : vector<64x36xbf16> to vector<64x4xbf16>
    %c5_i32 = arith.constant 5 : i32
    %60 = vector.broadcast %c5_i32 : i32 to vector<64x1xi32>
    %61 = arith.shrsi %9, %60 : vector<64x1xi32>
    %c1_i32_22 = arith.constant 1 : i32
    %62 = vector.broadcast %c1_i32_22 : i32 to vector<64x1xi32>
    %63 = arith.andi %61, %62 : vector<64x1xi32>
    %c0_i32_23 = arith.constant 0 : i32
    %64 = vector.broadcast %c0_i32_23 : i32 to vector<64x1xi32>
    %65 = arith.cmpi sgt, %63, %64 : vector<64x1xi32>
    %cst_24 = arith.constant 0xFF80 : bf16
    %66 = vector.shape_cast %65 : vector<64x1xi1> to vector<64x1xi1>
    %67 = vector.broadcast %66 : vector<64x1xi1> to vector<64x4xi1>
    %68 = vector.broadcast %cst_24 : bf16 to vector<64x4xbf16>
    %69 = arith.select %67, %59, %68 : vector<64x4xi1>, vector<64x4xbf16>
    %70 = arith.maximumf %58, %69 : vector<64x4xbf16>
    %71 = vector.extract_strided_slice %0 {offsets = [0, 24], sizes = [64, 4], strides = [1, 1]} : vector<64x36xbf16> to vector<64x4xbf16>
    %c6_i32 = arith.constant 6 : i32
    %72 = vector.broadcast %c6_i32 : i32 to vector<64x1xi32>
    %73 = arith.shrsi %9, %72 : vector<64x1xi32>
    %c1_i32_25 = arith.constant 1 : i32
    %74 = vector.broadcast %c1_i32_25 : i32 to vector<64x1xi32>
    %75 = arith.andi %73, %74 : vector<64x1xi32>
    %c0_i32_26 = arith.constant 0 : i32
    %76 = vector.broadcast %c0_i32_26 : i32 to vector<64x1xi32>
    %77 = arith.cmpi sgt, %75, %76 : vector<64x1xi32>
    %cst_27 = arith.constant 0xFF80 : bf16
    %78 = vector.shape_cast %77 : vector<64x1xi1> to vector<64x1xi1>
    %79 = vector.broadcast %78 : vector<64x1xi1> to vector<64x4xi1>
    %80 = vector.broadcast %cst_27 : bf16 to vector<64x4xbf16>
    %81 = arith.select %79, %71, %80 : vector<64x4xi1>, vector<64x4xbf16>
    %82 = arith.maximumf %70, %81 : vector<64x4xbf16>
    %83 = vector.extract_strided_slice %0 {offsets = [0, 28], sizes = [64, 4], strides = [1, 1]} : vector<64x36xbf16> to vector<64x4xbf16>
    %c7_i32 = arith.constant 7 : i32
    %84 = vector.broadcast %c7_i32 : i32 to vector<64x1xi32>
    %85 = arith.shrsi %9, %84 : vector<64x1xi32>
    %c1_i32_28 = arith.constant 1 : i32
    %86 = vector.broadcast %c1_i32_28 : i32 to vector<64x1xi32>
    %87 = arith.andi %85, %86 : vector<64x1xi32>
    %c0_i32_29 = arith.constant 0 : i32
    %88 = vector.broadcast %c0_i32_29 : i32 to vector<64x1xi32>
    %89 = arith.cmpi sgt, %87, %88 : vector<64x1xi32>
    %cst_30 = arith.constant 0xFF80 : bf16
    %90 = vector.shape_cast %89 : vector<64x1xi1> to vector<64x1xi1>
    %91 = vector.broadcast %90 : vector<64x1xi1> to vector<64x4xi1>
    %92 = vector.broadcast %cst_30 : bf16 to vector<64x4xbf16>
    %93 = arith.select %91, %83, %92 : vector<64x4xi1>, vector<64x4xbf16>
    %94 = arith.maximumf %82, %93 : vector<64x4xbf16>
    %95 = vector.extract_strided_slice %0 {offsets = [0, 32], sizes = [64, 4], strides = [1, 1]} : vector<64x36xbf16> to vector<64x4xbf16>
    %c8_i32 = arith.constant 8 : i32
    %96 = vector.broadcast %c8_i32 : i32 to vector<64x1xi32>
    %97 = arith.shrsi %9, %96 : vector<64x1xi32>
    %c1_i32_31 = arith.constant 1 : i32
    %98 = vector.broadcast %c1_i32_31 : i32 to vector<64x1xi32>
    %99 = arith.andi %97, %98 : vector<64x1xi32>
    %c0_i32_32 = arith.constant 0 : i32
    %100 = vector.broadcast %c0_i32_32 : i32 to vector<64x1xi32>
    %101 = arith.cmpi sgt, %99, %100 : vector<64x1xi32>
    %cst_33 = arith.constant 0xFF80 : bf16
    %102 = vector.shape_cast %101 : vector<64x1xi1> to vector<64x1xi1>
    %103 = vector.broadcast %102 : vector<64x1xi1> to vector<64x4xi1>
    %104 = vector.broadcast %cst_33 : bf16 to vector<64x4xbf16>
    %105 = arith.select %103, %95, %104 : vector<64x4xi1>, vector<64x4xbf16>
    %106 = arith.maximumf %94, %105 : vector<64x4xbf16>
    %107 = arith.extf %106 : vector<64x4xbf16> to vector<64x4xf32>
    %cst_34 = arith.constant 0.000000e+00 : f32
    %108 = vector.broadcast %cst_34 : f32 to vector<64x124xf32>
    %109 = tpu.concatenate %107, %108 in 1 : vector<64x4xf32>, vector<64x124xf32> -> vector<64x128xf32>
    %c0_35 = arith.constant 0 : index
    %c0_36 = arith.constant 0 : index
    %110 = vector.load %arg6[%c0_35, %c0_36] : memref<64x128xf32, #tpu.memory_space<vmem>>, vector<64x128xf32>
    tpu.vector_store %arg6[%c0_35, %c0_36], %109 {strides = array<i32>} : memref<64x128xf32, #tpu.memory_space<vmem>>, vector<64x128xf32>,
    return
  }
  func.func @transform_0(%arg0: i32) -> (i32, i32) {
    %c0_i32 = arith.constant 0 : i32
    %c0_i32_0 = arith.constant 0 : i32
    return %arg0, %c0_i32 : i32, i32
  }
  func.func @transform_1(%arg0: i32) -> (i32, i32) {
    %c0_i32 = arith.constant 0 : i32
    %c0_i32_0 = arith.constant 0 : i32
    %c0_i32_1 = arith.constant 0 : i32
    return %c0_i32, %c0_i32_0 : i32, i32
  }
  func.func @transform_2(%arg0: i32) -> (i32, i32) {
    %c0_i32 = arith.constant 0 : i32
    %c0_i32_0 = arith.constant 0 : i32
    %c0_i32_1 = arith.constant 0 : i32
    return %c0_i32, %c0_i32_0 : i32, i32
  }
  func.func @transform_3(%arg0: i32) -> (i32, i32) {
    %c0_i32 = arith.constant 0 : i32
    %c0_i32_0 = arith.constant 0 : i32
    return %arg0, %c0_i32 : i32, i32
  }
  func.func @transform_4(%arg0: i32) -> (i32, i32) {
    %c0_i32 = arith.constant 0 : i32
    %c0_i32_0 = arith.constant 0 : i32
    return %arg0, %c0_i32 : i32, i32
  }
  func.func @transform_5(%arg0: i32) -> (i32, i32) {
    %c0_i32 = arith.constant 0 : i32
    %c0_i32_0 = arith.constant 0 : i32
    return %arg0, %c0_i32 : i32, i32
  }
}

</mosaic_0001>

<llo_original>
// kernel: tpu_custom_call.1
$region0: #{tpu_custom_call.1}
  #allocation0 [shape = 'u32[]', space=smem, size = 0x4, offset = 0x4, fixed_abs, tag = 'smem constant byte address 0x4 - core index']
  #allocation1 [shape = 'u32[144,128]{1,0:T(1,128)}', space=vmem, size = 0x12000, scoped, tag = 'internal scratch']
  %s0 = inlined_call_operand.vmem [shape: bf16[128,36], index: 0, kind: input, shape index: {}]
  %s1 = inlined_call_operand.vmem [shape: bf16[36,128], index: 1, kind: input, shape index: {}]
  %s2 = inlined_call_operand.vmem [shape: f32[1,128], index: 2, kind: input, shape index: {}]
  %s3 = inlined_call_operand.vmem [shape: s32[128,1], index: 3, kind: input, shape index: {}]
  %s4 = inlined_call_operand.hbm [shape: f32[128,128], index: 4, kind: output, shape index: {0}]
  %s5 = inlined_call_operand.hbm [shape: f32[128,128], index: 5, kind: output, shape index: {1}]
  %6 = xla_tuple %s4, %s5
  %s7 = sld [smem:[#allocation0]]
  $region57: #{tpu_custom_call.1} parent=0
    _
  %s9 = ssub.s32 1, %s7
  %s10 = scalar_select 0, %s9, %s7
  $region1: #{tpu_custom_call.1} parent=0
    #allocation2 [shape = 'u8[65536]{0}', space=vmem, size = 0x10000, scoped, tag = 'output window, operand 0']
    #allocation3 [shape = 's32[2]{0}', space=sflag, size = 0x8, scoped, tag = 'scoped memory for tpu_custom_call.1']
    #allocation4 [shape = 'u8[65536]{0}', space=vmem, size = 0x10000, scoped, tag = 'output window, operand 1']
    #allocation5 [shape = 's32[2]{0}', space=sflag, size = 0x8, scoped, tag = 'scoped memory for tpu_custom_call.1']
    %11 = vsyncpa [#allocation3], 0
    %s12 = scalar_lea.sflag [#allocation3], 1
    %13 = vsyncpa %s12, 0
    %14 = vsyncpa [#allocation5], 0
    %s15 = scalar_lea.sflag [#allocation5], 1
    %16 = vsyncpa %s15, 0
    loop: start=0, step=1, limit=4
    $region2: #{tpu_custom_call.1} parent=1 // loop_pre_header
      _
    $region3: #{tpu_custom_call.1} parent=1 // loop_header
      %s18 = sphi 0, %s22
      %p19 = scmp.ge.s32.totalorder %s18, 4
      %s28 = sphi 0, %s30
      %s31 = sphi 0, %s28
      %s32 = sphi 0, %s31
      %s48 = sphi 0, %s32
      %s52 = sphi 0, %s52
      %s54 = sphi 0, %s52
      %s55 = sphi 0, %s54
      %s69 = sphi 0, %s55
      %s73 = sphi 0, %s73
      %s75 = sphi 0, %s73
      %s76 = sphi 0, %s75
      %s90 = sphi 0, %s76
      %s96 = sphi 0, %s98
      %s99 = sphi 0, %s96
      %s100 = sphi 0, %s99
      %s116 = sphi 0, %s100
      %s122 = sphi 0, %s124
      %s125 = sphi 0, %s122
      %s126 = sphi 0, %s125
      %s142 = sphi 0, %s126
      %s148 = sphi 0, %s150
      %s151 = sphi 0, %s148
      %s152 = sphi 0, %s151
      %s168 = sphi 0, %s152
    $region4: #{tpu_custom_call.1} parent=1 // loop_header_branch
      %21 = sbr.rel (%p19) target = $region8
    $region5: #{tpu_custom_call.1} parent=1 // loop_body
      %s23 = ssub.s32 %s18, 1
      %s24 = ssub.s32 %s18, 2
      %s25 = sadd.s32 %s18, 1
      %s26 = ssub.s32 %s18, %s25
      %p27 = scmp.eq.s32.totalorder %s26, 0
      %s29 = sadd.s32 %s28, 1
      %s30 = scalar_select %p27, %s28, %s29
      %p33 = pneg %p27
      %p34 = scmp.eq.s32.totalorder %s18, 1
      %p35 = por %p33, %p34
      %p36 = scmp.ne.s32.totalorder %s28, %s31
      %p37 = scmp.eq.s32.totalorder %s18, 0
      %p38 = por %p36, %p37
      %p39 = scmp.ne.s32.totalorder %s28, %s31
      %p40 = scmp.eq.s32.totalorder %s23, 1
      %p41 = por %p39, %p40
      %p42 = scmp.ne.s32.totalorder %s31, %s32
      %p43 = scmp.eq.s32.totalorder %s23, 0
      %p44 = por %p42, %p43
      %p45 = scmp.ne.s32.totalorder %s31, %s32
      %p46 = scmp.eq.s32.totalorder %s24, 1
      %p47 = por %p45, %p46
      %p49 = scmp.ne.s32.totalorder %s32, %s48
      %p50 = scmp.eq.s32.totalorder %s24, 0
      %p51 = por %p49, %p50
      %s53 = sadd.s32 %s52, 1
      %p56 = scmp.eq.s32.totalorder %s18, 1
      %p57 = scmp.ne.s32.totalorder %s52, %s54
      %p58 = scmp.eq.s32.totalorder %s18, 0
      %p59 = por %p57, %p58
      %p60 = scmp.ne.s32.totalorder %s52, %s54
      %p61 = scmp.eq.s32.totalorder %s23, 1
      %p62 = por %p60, %p61
      %p63 = scmp.ne.s32.totalorder %s54, %s55
      %p64 = scmp.eq.s32.totalorder %s23, 0
      %p65 = por %p63, %p64
      %p66 = scmp.ne.s32.totalorder %s54, %s55
      %p67 = scmp.eq.s32.totalorder %s24, 1
      %p68 = por %p66, %p67
      %p70 = scmp.ne.s32.totalorder %s55, %s69
      %p71 = scmp.eq.s32.totalorder %s24, 0
      %p72 = por %p70, %p71
      %s74 = sadd.s32 %s73, 1
      %p77 = scmp.eq.s32.totalorder %s18, 1
      %p78 = scmp.ne.s32.totalorder %s73, %s75
      %p79 = scmp.eq.s32.totalorder %s18, 0
      %p80 = por %p78, %p79
      %p81 = scmp.ne.s32.totalorder %s73, %s75
      %p82 = scmp.eq.s32.totalorder %s23, 1
      %p83 = por %p81, %p82
      %p84 = scmp.ne.s32.totalorder %s75, %s76
      %p85 = scmp.eq.s32.totalorder %s23, 0
      %p86 = por %p84, %p85
      %p87 = scmp.ne.s32.totalorder %s75, %s76
      %p88 = scmp.eq.s32.totalorder %s24, 1
      %p89 = por %p87, %p88
      %p91 = scmp.ne.s32.totalorder %s76, %s90
      %p92 = scmp.eq.s32.totalorder %s24, 0
      %p93 = por %p91, %p92
      %s94 = ssub.s32 %s18, %s25
      %p95 = scmp.eq.s32.totalorder %s94, 0
      %s97 = sadd.s32 %s96, 1
      %s98 = scalar_select %p95, %s96, %s97
      %p101 = pneg %p95
      %p102 = scmp.eq.s32.totalorder %s18, 1
      %p103 = por %p101, %p102
      %p104 = scmp.ne.s32.totalorder %s96, %s99
      %p105 = scmp.eq.s32.totalorder %s18, 0
      %p106 = por %p104, %p105
      %p107 = scmp.ne.s32.totalorder %s96, %s99
      %p108 = scmp.eq.s32.totalorder %s23, 1
      %p109 = por %p107, %p108
      %p110 = scmp.ne.s32.totalorder %s99, %s100
      %p111 = scmp.eq.s32.totalorder %s23, 0
      %p112 = por %p110, %p111
      %p113 = scmp.ne.s32.totalorder %s99, %s100
      %p114 = scmp.eq.s32.totalorder %s24, 1
      %p115 = por %p113, %p114
      %p117 = scmp.ne.s32.totalorder %s100, %s116
      %p118 = scmp.eq.s32.totalorder %s24, 0
      %p119 = por %p117, %p118
      %s120 = ssub.s32 %s18, %s25
      %p121 = scmp.eq.s32.totalorder %s120, 0
      %s123 = sadd.s32 %s122, 1
      %s124 = scalar_select %p121, %s122, %s123
      %p127 = pneg %p121
      %p128 = scmp.eq.s32.totalorder %s18, 1
      %p129 = por %p127, %p128
      %p130 = scmp.ne.s32.totalorder %s122, %s125
      %p131 = scmp.eq.s32.totalorder %s18, 0
      %p132 = por %p130, %p131
      %p133 = scmp.ne.s32.totalorder %s122, %s125
      %p134 = scmp.eq.s32.totalorder %s23, 1
      %p135 = por %p133, %p134
      %p136 = scmp.ne.s32.totalorder %s125, %s126
      %p137 = scmp.eq.s32.totalorder %s23, 0
      %p138 = por %p136, %p137
      %p139 = scmp.ne.s32.totalorder %s125, %s126
      %p140 = scmp.eq.s32.totalorder %s24, 1
      %p141 = por %p139, %p140
      %p143 = scmp.ne.s32.totalorder %s126, %s142
      %p144 = scmp.eq.s32.totalorder %s24, 0
      %p145 = por %p143, %p144
      %s146 = ssub.s32 %s18, %s25
      %p147 = scmp.eq.s32.totalorder %s146, 0
      %s149 = sadd.s32 %s148, 1
      %s150 = scalar_select %p147, %s148, %s149
      %p153 = pneg %p147
      %p154 = scmp.eq.s32.totalorder %s18, 1
      %p155 = por %p153, %p154
      %p156 = scmp.ne.s32.totalorder %s148, %s151
      %p157 = scmp.eq.s32.totalorder %s18, 0
      %p158 = por %p156, %p157
      %p159 = scmp.ne.s32.totalorder %s148, %s151
      %p160 = scmp.eq.s32.totalorder %s23, 1
      %p161 = por %p159, %p160
      %p162 = scmp.ne.s32.totalorder %s151, %s152
      %p163 = scmp.eq.s32.totalorder %s23, 0
      %p164 = por %p162, %p163
      %p165 = scmp.ne.s32.totalorder %s151, %s152
      %p166 = scmp.eq.s32.totalorder %s24, 1
      %p167 = por %p165, %p166
      %p169 = scmp.ne.s32.totalorder %s152, %s168
      %p170 = scmp.eq.s32.totalorder %s24, 0
      %p171 = por %p169, %p170
      %p172 = scmp.le.s32.totalorder 1, %s18
      %p173 = scmp.lt.s32.totalorder %s18, 3
      %p174 = pnand %p172, %p173
      %p175 = pneg %p174
      // Predicated region
      $region9: #{tpu_custom_call.1} parent=5 // pred_check
        _
      $region10: #{tpu_custom_call.1} parent=5 // pred_check_branch
        %177 = sbr.rel (%p174) target = $region12
      $region11: #{tpu_custom_call.1} parent=5 // pred_region
        %s178 = ssub.s32 %s18, 1
        // Predicated region
        $region13: #{tpu_custom_call.1} parent=11 // pred_check
          %p179 = pneg %p65
        $region14: #{tpu_custom_call.1} parent=11 // pred_check_branch
          %181 = sbr.rel (%p179) target = $region16
        $region15: #{tpu_custom_call.1} parent=11 // pred_region
          _
        $region16: #{tpu_custom_call.1} parent=11 // pred_fallthru
          _
        // Predicated region
        $region17: #{tpu_custom_call.1} parent=11 // pred_check
          %p182 = pneg %p86
        $region18: #{tpu_custom_call.1} parent=11 // pred_check_branch
          %184 = sbr.rel (%p182) target = $region20
        $region19: #{tpu_custom_call.1} parent=11 // pred_region
          _
        $region20: #{tpu_custom_call.1} parent=11 // pred_fallthru
          _
      $region12: #{tpu_custom_call.1} parent=5 // pred_fallthru
        _
      %p185 = scmp.lt.s32.totalorder %s18, 2
      // Predicated region
      $region21: #{tpu_custom_call.1} parent=5 // pred_check
        %p186 = pneg %p185
      $region22: #{tpu_custom_call.1} parent=5 // pred_check_branch
        %188 = sbr.rel (%p186) target = $region24
      $region23: #{tpu_custom_call.1} parent=5 // pred_region
        // Predicated region
        $region25: #{tpu_custom_call.1} parent=23 // pred_check
          %p189 = pneg %p38
        $region26: #{tpu_custom_call.1} parent=23 // pred_check_branch
          %191 = sbr.rel (%p189) target = $region28
        $region27: #{tpu_custom_call.1} parent=23 // pred_region
          %s192 = smul.u32 8, %s18
          %p193 = scmp.lt.s32.totalorder %s192, 15
          %s194 = scalar_select %p193, %s192, 15
          %s195 = smul.addr %s194, 4
          %s196 = scalar_lea.vmem %s0, %s195
          %s197 = smul.u32 8, %s18
        $region28: #{tpu_custom_call.1} parent=23 // pred_fallthru
          _
        // Predicated region
        $region29: #{tpu_custom_call.1} parent=23 // pred_check
          %p198 = pneg %p106
        $region30: #{tpu_custom_call.1} parent=23 // pred_check_branch
          %200 = sbr.rel (%p198) target = $region32
        $region31: #{tpu_custom_call.1} parent=23 // pred_region
          %s201 = smul.u32 8, %s18
          %p202 = scmp.lt.s32.totalorder %s201, 15
          %s203 = scalar_select %p202, %s201, 15
          %s204 = smul.addr %s203, 8
          %s205 = scalar_lea.vmem %s3, %s204
          %s206 = smul.u32 8, %s18
        $region32: #{tpu_custom_call.1} parent=23 // pred_fallthru
          _
      $region24: #{tpu_custom_call.1} parent=5 // pred_fallthru
        _
      %p207 = scmp.le.s32.totalorder 1, %s18
      %p208 = scmp.lt.s32.totalorder %s18, 3
      %p209 = pnand %p207, %p208
      %p210 = pneg %p209
      // Predicated region
      $region33: #{tpu_custom_call.1} parent=5 // pred_check
        _
      $region34: #{tpu_custom_call.1} parent=5 // pred_check_branch
        %212 = sbr.rel (%p209) target = $region36
      $region35: #{tpu_custom_call.1} parent=5 // pred_region
        %s213 = ssub.s32 %s18, 1
        %s214 = smul.u32 8, %s23
        %p215 = scmp.lt.s32.totalorder %s214, 15
        %s216 = scalar_select %p215, %s214, 15
        %s217 = smul.addr %s216, 4
        %s218 = scalar_lea.vmem %s0, %s217
        %p219 = pneg %p44
        %p220 = pneg %p41
        %p221 = pneg %p65
        %p222 = pneg %p62
        %p223 = pneg %p86
        %p224 = pneg %p83
        %s225 = smul.u32 8, %s23
        %p226 = scmp.lt.s32.totalorder %s225, 15
        %s227 = scalar_select %p226, %s225, 15
        %s228 = smul.addr %s227, 8
        %s229 = scalar_lea.vmem %s3, %s228
        %p230 = pneg %p112
        %p231 = pneg %p109
        %p232 = pneg %p138
        %p233 = pneg %p135
        %s234 = sand.u32 %s125, 1
        %s235 = scalar_lea.sflag [#allocation3], %s234
        %s236 = sand.u32 %s125, 1
        %s237 = smul.addr %s236, 64
        %s238 = scalar_lea.vmem [#allocation2], %s237
        %p239 = pneg %p164
        %p240 = pneg %p161
        %s241 = sand.u32 %s151, 1
        %s242 = scalar_lea.sflag [#allocation5], %s241
        %s243 = sand.u32 %s151, 1
        %s244 = smul.addr %s243, 64
        %s245 = scalar_lea.vmem [#allocation4], %s244
        %s246 = smul.u32 8, %s23
        %p247 = scmp.lt.s32.totalorder %s246, 15
        %s248 = scalar_select %p247, %s246, 15
        %s249 = smul.addr %s248, 4
        %s250 = scalar_lea.vmem %s0, %s249
        %s251 = smul.u32 8, %s23
        %s252 = smul.u32 8, %s23
        %p253 = scmp.lt.s32.totalorder %s252, 15
        %s254 = scalar_select %p253, %s252, 15
        %s255 = smul.addr %s254, 8
        %s256 = scalar_lea.vmem %s3, %s255
        %s257 = smul.u32 8, %s23
        %s258 = smul.u32 8, %s23
        %s259 = smul.u32 8, %s23
        %v262 = vld [vmem:[%s250] sm:$0xf]
        %v263 = vld [vmem:[%s250 + $0x4] sm:$0xf]
        %v264 = vld [vmem:[%s250 + $0x8] sm:$0xf]
        %v265 = vld [vmem:[%s250 + $0xc] sm:$0xf]
        %v266 = vld [vmem:[%s250 + $0x10] sm:$0xf]
        %v267 = vld [vmem:[%s250 + $0x14] sm:$0xf]
        %v268 = vld [vmem:[%s250 + $0x18] sm:$0xf]
        %v269 = vld [vmem:[%s250 + $0x1c] sm:$0xf]
        %v270 = vld [vmem:[%s1] sm:$0xf]
        %v271 = vld [vmem:[%s1 + $0x4] sm:$0xf]
        %v272 = vld [vmem:[%s1 + $0x8] sm:$0xf]
        %v273 = vld [vmem:[%s1 + $0xc] sm:$0xf]
        %v274 = vld [vmem:[%s1 + $0x10] sm:$0x3]
        %v275 = vld [vmem:[%s2] sm:$0x1]
        %v277 = vlaneseq
        %v278 = vshrl.u32 %v277, 7
        %v279 = vsub.s32 0, %v278
        %v280 = vrot.slane %v275, %v279
        %v290 = vunpack.c.l.b16 %v262
        %v291 = vunpack.c.l.b16 %v263
        %v292 = vunpack.c.l.b16 %v264
        %v293 = vunpack.c.l.b16 %v265
        %v294 = vunpack.c.l.b16 %v266
        %v295 = vunpack.c.l.b16 %v267
        %v296 = vunpack.c.l.b16 %v268
        %v297 = vunpack.c.l.b16 %v269
        %v298 = vpack.c.b16 %v291, %v290
        %v299 = vpack.c.b16 %v293, %v292
        %v300 = vpack.c.b16 %v295, %v294
        %v301 = vpack.c.b16 %v297, %v296
        %v307 = vunpack.c.l.b16 %v270
        %v308 = vunpack.c.l.b16 %v271
        %v309 = vunpack.c.l.b16 %v272
        %v310 = vunpack.c.l.b16 %v273
        %v311 = vunpack.c.l.b16 %v274
        %v312 = vpack.c.b16 %v308, %v307
        %v313 = vpack.c.b16 %v310, %v309
        %v314 = vpack.c.b16 %v311, %v311
        %vm317 = vcmask 293888
        %v319 = vsel %vm317, %v298, 0
        %v322 = vsel %vm317, %v299, 0
        %v325 = vsel %vm317, %v300, 0
        %v328 = vsel %vm317, %v301, 0
        %vm330 = vcmask 1041408
        %v332 = vsel %vm330, %v314, 0
        %334 = vmatprep.subr.bf16.mxu0 0
        %335 = vmatpush1.bf16.msra.mxu0 %v312
        %336 = vmatprep.subr.bf16.mxu0 0
        %337 = vmatpush1.bf16.msra.mxu0 %v313
        %338 = vmatprep.subr.bf16.mxu0 0
        %339 = vmatpush1.bf16.msra.mxu0 %v332
        %340 = vmatprep.subr.bf16.mxu0 0
        %341 = vmatpush1.bf16.msra.mxu0 0
        %342 = vmatprep.subr.bf16.mxu0 0
        %343 = vmatpush1.bf16.msra.mxu0 0
        %344 = vmatprep.subr.bf16.mxu0 0
        %345 = vmatpush1.bf16.msra.mxu0 0
        %346 = vmatprep.subr.bf16.mxu0 0
        %347 = vmatpush1.bf16.msra.mxu0 0
        %348 = vmatprep.subr.bf16.mxu0 0
        %349 = vmatpush1.bf16.msra.mxu0 0
        %350 = vmatprep.subr.bf16.mxu0 0
        %351 = vmatpush1.bf16.msra.mxu0 0
        %352 = vmatprep.subr.bf16.mxu0 0
        %353 = vmatpush1.bf16.msra.mxu0 0
        %354 = vmatprep.subr.bf16.mxu0 0
        %355 = vmatpush1.bf16.msra.mxu0 0
        %356 = vmatprep.subr.bf16.mxu0 0
        %357 = vmatpush1.bf16.msra.mxu0 0
        %358 = vmatprep.subr.bf16.mxu0 0
        %359 = vmatpush1.bf16.msra.mxu0 0
        %360 = vmatprep.subr.bf16.mxu0 0
        %361 = vmatpush1.bf16.msra.mxu0 0
        %362 = vmatprep.subr.bf16.mxu0 0
        %363 = vmatpush1.bf16.msra.mxu0 0
        %364 = vmatprep.subr.bf16.mxu0 0
        %365 = vmatpush1.bf16.msra.mxu0 0
        %366 = vmatprep.mubr.bf16.mxu0 0
        %367 = vmatmul.mubr.bf16.gmra.mrb[0].mxu0 %v319
        %v368 = vpop.f32.mrb[0].mxu0
        %v369 = vadd.f32 %v280, %v368
        %v370 = vpop.f32.mrb[0].mxu0
        %v371 = vpop.f32.mrb[0].mxu0
        %v372 = vadd.f32 %v280, %v371
        %v373 = vpop.f32.mrb[0].mxu0
        %374 = vmatprep.mubr.bf16.mxu0 0
        %375 = vmatmul.mubr.bf16.gmra.mrb[0].mxu0 %v322
        %v376 = vpop.f32.mrb[0].mxu0
        %v377 = vadd.f32 %v280, %v376
        %v378 = vpop.f32.mrb[0].mxu0
        %v379 = vpop.f32.mrb[0].mxu0
        %v380 = vadd.f32 %v280, %v379
        %v381 = vpop.f32.mrb[0].mxu0
        %382 = vmatprep.mubr.bf16.mxu0 0
        %383 = vmatmul.mubr.bf16.gmra.mrb[0].mxu0 %v325
        %v384 = vpop.f32.mrb[0].mxu0
        %v385 = vadd.f32 %v280, %v384
        %v386 = vpop.f32.mrb[0].mxu0
        %v387 = vpop.f32.mrb[0].mxu0
        %v388 = vadd.f32 %v280, %v387
        %v389 = vpop.f32.mrb[0].mxu0
        %390 = vmatprep.mubr.bf16.mxu0 0
        %391 = vmatmul.mubr.bf16.gmra.mrb[0].mxu0 %v328
        %v392 = vpop.f32.mrb[0].mxu0
        %v393 = vadd.f32 %v280, %v392
        %v394 = vpop.f32.mrb[0].mxu0
        %v395 = vpop.f32.mrb[0].mxu0
        %v396 = vadd.f32 %v280, %v395
        %v397 = vpop.f32.mrb[0].mxu0
        %398 = vdwg.mxu0
        %v399 = vmax.f32 %v369, 0.0
        %v400 = vmax.f32 %v372, 0.0
        %v401 = vmax.f32 %v377, 0.0
        %v402 = vmax.f32 %v380, 0.0
        %v403 = vmax.f32 %v385, 0.0
        %v404 = vmax.f32 %v388, 0.0
        %v405 = vmax.f32 %v393, 0.0
        %v406 = vmax.f32 %v396, 0.0
        %407 = vst [vmem:[%s238] sm:$0xff] %v399
        %408 = vst [vmem:[%s238 + $0x8] sm:$0xff] %v400
        %409 = vst [vmem:[%s238 + $0x10] sm:$0xff] %v401
        %410 = vst [vmem:[%s238 + $0x18] sm:$0xff] %v402
        %411 = vst [vmem:[%s238 + $0x20] sm:$0xff] %v403
        %412 = vst [vmem:[%s238 + $0x28] sm:$0xff] %v404
        %413 = vst [vmem:[%s238 + $0x30] sm:$0xff] %v405
        %414 = vst [vmem:[%s238 + $0x38] sm:$0xff] %v406
        %v415 = vld [vmem:[%s256] sm:$0xff]
        %v416 = vld [vmem:[%s256 + $0x8] sm:$0xff]
        %v417 = vld [vmem:[%s256 + $0x10] sm:$0xff]
        %v418 = vld [vmem:[%s256 + $0x18] sm:$0xff]
        %v419 = vld [vmem:[%s256 + $0x20] sm:$0xff]
        %v420 = vld [vmem:[%s256 + $0x28] sm:$0xff]
        %v421 = vld [vmem:[%s256 + $0x30] sm:$0xff]
        %v422 = vld [vmem:[%s256 + $0x38] sm:$0xff]
        %v423 = vand.u32 %v415, 1
        %v424 = vand.u32 %v416, 1
        %v425 = vand.u32 %v417, 1
        %v426 = vand.u32 %v418, 1
        %v427 = vand.u32 %v419, 1
        %v428 = vand.u32 %v420, 1
        %v429 = vand.u32 %v421, 1
        %v430 = vand.u32 %v422, 1
        %vm431 = vcmp.gt.s32.totalorder %v423, 0
        %vm432 = vcmp.gt.s32.totalorder %v424, 0
        %vm433 = vcmp.gt.s32.totalorder %v425, 0
        %vm434 = vcmp.gt.s32.totalorder %v426, 0
        %vm435 = vcmp.gt.s32.totalorder %v427, 0
        %vm436 = vcmp.gt.s32.totalorder %v428, 0
        %vm437 = vcmp.gt.s32.totalorder %v429, 0
        %vm438 = vcmp.gt.s32.totalorder %v430, 0
        %v439 = vsel %vm431, 1, 0
        %v440 = vsel %vm432, 1, 0
        %v441 = vsel %vm433, 1, 0
        %v442 = vsel %vm434, 1, 0
        %v443 = vsel %vm435, 1, 0
        %v444 = vsel %vm436, 1, 0
        %v445 = vsel %vm437, 1, 0
        %v446 = vsel %vm438, 1, 0
        %447 = vset.pattern.permute.xlu0 0
        %448 = vperm.xlu0 %447, %v439
        %v449 = vpop.permute.xlu0 %448
        %450 = vset.pattern.permute.xlu0 0
        %451 = vperm.xlu0 %450, %v440
        %v452 = vpop.permute.xlu0 %451
        %453 = vset.pattern.permute.xlu0 0
        %454 = vperm.xlu0 %453, %v441
        %v455 = vpop.permute.xlu0 %454
        %456 = vset.pattern.permute.xlu0 0
        %457 = vperm.xlu0 %456, %v442
        %v458 = vpop.permute.xlu0 %457
        %459 = vset.pattern.permute.xlu0 0
        %460 = vperm.xlu0 %459, %v443
        %v461 = vpop.permute.xlu0 %460
        %462 = vset.pattern.permute.xlu0 0
        %463 = vperm.xlu0 %462, %v444
        %v464 = vpop.permute.xlu0 %463
        %465 = vset.pattern.permute.xlu0 0
        %466 = vperm.xlu0 %465, %v445
        %v467 = vpop.permute.xlu0 %466
        %468 = vset.pattern.permute.xlu0 0
        %469 = vperm.xlu0 %468, %v446
        %v470 = vpop.permute.xlu0 %469
        %vm471 = vcmp.eq.s32.totalorder %v449, 1
        %vm472 = vcmp.eq.s32.totalorder %v452, 1
        %vm473 = vcmp.eq.s32.totalorder %v455, 1
        %vm474 = vcmp.eq.s32.totalorder %v458, 1
        %vm475 = vcmp.eq.s32.totalorder %v461, 1
        %vm476 = vcmp.eq.s32.totalorder %v464, 1
        %vm477 = vcmp.eq.s32.totalorder %v467, 1
        %vm478 = vcmp.eq.s32.totalorder %v470, 1
        %vm479 = vmpackc.low %vm471, %vm471
        %vm480 = vmpackc.low %vm472, %vm472
        %vm481 = vmpackc.low %vm473, %vm473
        %vm482 = vmpackc.low %vm474, %vm474
        %vm483 = vmpackc.low %vm475, %vm475
        %vm484 = vmpackc.low %vm476, %vm476
        %vm485 = vmpackc.low %vm477, %vm477
        %vm486 = vmpackc.low %vm478, %vm478
        %v487 = vsel %vm479, %v262, 4286644096
        %v488 = vsel %vm480, %v263, 4286644096
        %v489 = vsel %vm481, %v264, 4286644096
        %v490 = vsel %vm482, %v265, 4286644096
        %v491 = vsel %vm483, %v266, 4286644096
        %v492 = vsel %vm484, %v267, 4286644096
        %v493 = vsel %vm485, %v268, 4286644096
        %v494 = vsel %vm486, %v269, 4286644096
        %503 = vrot.lane.b32.xlu0 %v487, 16
        %v504 = vpop.permute.xlu0 %503
        %505 = vrot.lane.b32.xlu0 %v488, 16
        %v506 = vpop.permute.xlu0 %505
        %507 = vrot.lane.b32.xlu0 %v489, 16
        %v508 = vpop.permute.xlu0 %507
        %509 = vrot.lane.b32.xlu0 %v490, 16
        %v510 = vpop.permute.xlu0 %509
        %511 = vrot.lane.b32.xlu0 %v491, 16
        %v512 = vpop.permute.xlu0 %511
        %513 = vrot.lane.b32.xlu0 %v492, 16
        %v514 = vpop.permute.xlu0 %513
        %515 = vrot.lane.b32.xlu0 %v493, 16
        %v516 = vpop.permute.xlu0 %515
        %517 = vrot.lane.b32.xlu0 %v494, 16
        %v518 = vpop.permute.xlu0 %517
        %v527 = vmax.bf16 %v262, %v504
        %v528 = vmax.bf16 %v263, %v506
        %v529 = vmax.bf16 %v264, %v508
        %v530 = vmax.bf16 %v265, %v510
        %v531 = vmax.bf16 %v266, %v512
        %v532 = vmax.bf16 %v267, %v514
        %v533 = vmax.bf16 %v268, %v516
        %v534 = vmax.bf16 %v269, %v518
        %v535 = vshra.s32 %v415, 1
        %v536 = vshra.s32 %v416, 1
        %v537 = vshra.s32 %v417, 1
        %v538 = vshra.s32 %v418, 1
        %v539 = vshra.s32 %v419, 1
        %v540 = vshra.s32 %v420, 1
        %v541 = vshra.s32 %v421, 1
        %v542 = vshra.s32 %v422, 1
        %v543 = vand.u32 %v535, 1
        %v544 = vand.u32 %v536, 1
        %v545 = vand.u32 %v537, 1
        %v546 = vand.u32 %v538, 1
        %v547 = vand.u32 %v539, 1
        %v548 = vand.u32 %v540, 1
        %v549 = vand.u32 %v541, 1
        %v550 = vand.u32 %v542, 1
        %vm551 = vcmp.gt.s32.totalorder %v543, 0
        %vm552 = vcmp.gt.s32.totalorder %v544, 0
        %vm553 = vcmp.gt.s32.totalorder %v545, 0
        %vm554 = vcmp.gt.s32.totalorder %v546, 0
        %vm555 = vcmp.gt.s32.totalorder %v547, 0
        %vm556 = vcmp.gt.s32.totalorder %v548, 0
        %vm557 = vcmp.gt.s32.totalorder %v549, 0
        %vm558 = vcmp.gt.s32.totalorder %v550, 0
        %v559 = vsel %vm551, 1, 0
        %v560 = vsel %vm552, 1, 0
        %v561 = vsel %vm553, 1, 0
        %v562 = vsel %vm554, 1, 0
        %v563 = vsel %vm555, 1, 0
        %v564 = vsel %vm556, 1, 0
        %v565 = vsel %vm557, 1, 0
        %v566 = vsel %vm558, 1, 0
        %567 = vset.pattern.permute.xlu0 0
        %568 = vperm.xlu0 %567, %v559
        %v569 = vpop.permute.xlu0 %568
        %570 = vset.pattern.permute.xlu0 0
        %571 = vperm.xlu0 %570, %v560
        %v572 = vpop.permute.xlu0 %571
        %573 = vset.pattern.permute.xlu0 0
        %574 = vperm.xlu0 %573, %v561
        %v575 = vpop.permute.xlu0 %574
        %576 = vset.pattern.permute.xlu0 0
        %577 = vperm.xlu0 %576, %v562
        %v578 = vpop.permute.xlu0 %577
        %579 = vset.pattern.permute.xlu0 0
        %580 = vperm.xlu0 %579, %v563
        %v581 = vpop.permute.xlu0 %580
        %582 = vset.pattern.permute.xlu0 0
        %583 = vperm.xlu0 %582, %v564
        %v584 = vpop.permute.xlu0 %583
        %585 = vset.pattern.permute.xlu0 0
        %586 = vperm.xlu0 %585, %v565
        %v587 = vpop.permute.xlu0 %586
        %588 = vset.pattern.permute.xlu0 0
        %589 = vperm.xlu0 %588, %v566
        %v590 = vpop.permute.xlu0 %589
        %vm591 = vcmp.eq.s32.totalorder %v569, 1
        %vm592 = vcmp.eq.s32.totalorder %v572, 1
        %vm593 = vcmp.eq.s32.totalorder %v575, 1
        %vm594 = vcmp.eq.s32.totalorder %v578, 1
        %vm595 = vcmp.eq.s32.totalorder %v581, 1
        %vm596 = vcmp.eq.s32.totalorder %v584, 1
        %vm597 = vcmp.eq.s32.totalorder %v587, 1
        %vm598 = vcmp.eq.s32.totalorder %v590, 1
        %vm599 = vmpackc.low %vm591, %vm591
        %vm600 = vmpackc.low %vm592, %vm592
        %vm601 = vmpackc.low %vm593, %vm593
        %vm602 = vmpackc.low %vm594, %vm594
        %vm603 = vmpackc.low %vm595, %vm595
        %vm604 = vmpackc.low %vm596, %vm596
        %vm605 = vmpackc.low %vm597, %vm597
        %vm606 = vmpackc.low %vm598, %vm598
        %v607 = vsel %vm599, %v262, 4286644096
        %v608 = vsel %vm600, %v263, 4286644096
        %v609 = vsel %vm601, %v264, 4286644096
        %v610 = vsel %vm602, %v265, 4286644096
        %v611 = vsel %vm603, %v266, 4286644096
        %v612 = vsel %vm604, %v267, 4286644096
        %v613 = vsel %vm605, %v268, 4286644096
        %v614 = vsel %vm606, %v269, 4286644096
        %623 = vrot.lane.b32.xlu0 %v607, 12
        %v624 = vpop.permute.xlu0 %623
        %625 = vrot.lane.b32.xlu0 %v608, 12
        %v626 = vpop.permute.xlu0 %625
        %627 = vrot.lane.b32.xlu0 %v609, 12
        %v628 = vpop.permute.xlu0 %627
        %629 = vrot.lane.b32.xlu0 %v610, 12
        %v630 = vpop.permute.xlu0 %629
        %631 = vrot.lane.b32.xlu0 %v611, 12
        %v632 = vpop.permute.xlu0 %631
        %633 = vrot.lane.b32.xlu0 %v612, 12
        %v634 = vpop.permute.xlu0 %633
        %635 = vrot.lane.b32.xlu0 %v613, 12
        %v636 = vpop.permute.xlu0 %635
        %637 = vrot.lane.b32.xlu0 %v614, 12
        %v638 = vpop.permute.xlu0 %637
        %v647 = vmax.bf16 %v527, %v624
        %v648 = vmax.bf16 %v528, %v626
        %v649 = vmax.bf16 %v529, %v628
        %v650 = vmax.bf16 %v530, %v630
        %v651 = vmax.bf16 %v531, %v632
        %v652 = vmax.bf16 %v532, %v634
        %v653 = vmax.bf16 %v533, %v636
        %v654 = vmax.bf16 %v534, %v638
        %v655 = vshra.s32 %v415, 2
        %v656 = vshra.s32 %v416, 2
        %v657 = vshra.s32 %v417, 2
        %v658 = vshra.s32 %v418, 2
        %v659 = vshra.s32 %v419, 2
        %v660 = vshra.s32 %v420, 2
        %v661 = vshra.s32 %v421, 2
        %v662 = vshra.s32 %v422, 2
        %v663 = vand.u32 %v655, 1
        %v664 = vand.u32 %v656, 1
        %v665 = vand.u32 %v657, 1
        %v666 = vand.u32 %v658, 1
        %v667 = vand.u32 %v659, 1
        %v668 = vand.u32 %v660, 1
        %v669 = vand.u32 %v661, 1
        %v670 = vand.u32 %v662, 1
        %vm671 = vcmp.gt.s32.totalorder %v663, 0
        %vm672 = vcmp.gt.s32.totalorder %v664, 0
        %vm673 = vcmp.gt.s32.totalorder %v665, 0
        %vm674 = vcmp.gt.s32.totalorder %v666, 0
        %vm675 = vcmp.gt.s32.totalorder %v667, 0
        %vm676 = vcmp.gt.s32.totalorder %v668, 0
        %vm677 = vcmp.gt.s32.totalorder %v669, 0
        %vm678 = vcmp.gt.s32.totalorder %v670, 0
        %v679 = vsel %vm671, 1, 0
        %v680 = vsel %vm672, 1, 0
        %v681 = vsel %vm673, 1, 0
        %v682 = vsel %vm674, 1, 0
        %v683 = vsel %vm675, 1, 0
        %v684 = vsel %vm676, 1, 0
        %v685 = vsel %vm677, 1, 0
        %v686 = vsel %vm678, 1, 0
        %687 = vset.pattern.permute.xlu0 0
        %688 = vperm.xlu0 %687, %v679
        %v689 = vpop.permute.xlu0 %688
        %690 = vset.pattern.permute.xlu0 0
        %691 = vperm.xlu0 %690, %v680
        %v692 = vpop.permute.xlu0 %691
        %693 = vset.pattern.permute.xlu0 0
        %694 = vperm.xlu0 %693, %v681
        %v695 = vpop.permute.xlu0 %694
        %696 = vset.pattern.permute.xlu0 0
        %697 = vperm.xlu0 %696, %v682
        %v698 = vpop.permute.xlu0 %697
        %699 = vset.pattern.permute.xlu0 0
        %700 = vperm.xlu0 %699, %v683
        %v701 = vpop.permute.xlu0 %700
        %702 = vset.pattern.permute.xlu0 0
        %703 = vperm.xlu0 %702, %v684
        %v704 = vpop.permute.xlu0 %703
        %705 = vset.pattern.permute.xlu0 0
        %706 = vperm.xlu0 %705, %v685
        %v707 = vpop.permute.xlu0 %706
        %708 = vset.pattern.permute.xlu0 0
        %709 = vperm.xlu0 %708, %v686
        %v710 = vpop.permute.xlu0 %709
        %vm711 = vcmp.eq.s32.totalorder %v689, 1
        %vm712 = vcmp.eq.s32.totalorder %v692, 1
        %vm713 = vcmp.eq.s32.totalorder %v695, 1
        %vm714 = vcmp.eq.s32.totalorder %v698, 1
        %vm715 = vcmp.eq.s32.totalorder %v701, 1
        %vm716 = vcmp.eq.s32.totalorder %v704, 1
        %vm717 = vcmp.eq.s32.totalorder %v707, 1
        %vm718 = vcmp.eq.s32.totalorder %v710, 1
        %vm719 = vmpackc.low %vm711, %vm711
        %vm720 = vmpackc.low %vm712, %vm712
        %vm721 = vmpackc.low %vm713, %vm713
        %vm722 = vmpackc.low %vm714, %vm714
        %vm723 = vmpackc.low %vm715, %vm715
        %vm724 = vmpackc.low %vm716, %vm716
        %vm725 = vmpackc.low %vm717, %vm717
        %vm726 = vmpackc.low %vm718, %vm718
        %v727 = vsel %vm719, %v262, 4286644096
        %v728 = vsel %vm720, %v263, 4286644096
        %v729 = vsel %vm721, %v264, 4286644096
        %v730 = vsel %vm722, %v265, 4286644096
        %v731 = vsel %vm723, %v266, 4286644096
        %v732 = vsel %vm724, %v267, 4286644096
        %v733 = vsel %vm725, %v268, 4286644096
        %v734 = vsel %vm726, %v269, 4286644096
        %743 = vrot.lane.b32.xlu0 %v727, 8
        %v744 = vpop.permute.xlu0 %743
        %745 = vrot.lane.b32.xlu0 %v728, 8
        %v746 = vpop.permute.xlu0 %745
        %747 = vrot.lane.b32.xlu0 %v729, 8
        %v748 = vpop.permute.xlu0 %747
        %749 = vrot.lane.b32.xlu0 %v730, 8
        %v750 = vpop.permute.xlu0 %749
        %751 = vrot.lane.b32.xlu0 %v731, 8
        %v752 = vpop.permute.xlu0 %751
        %753 = vrot.lane.b32.xlu0 %v732, 8
        %v754 = vpop.permute.xlu0 %753
        %755 = vrot.lane.b32.xlu0 %v733, 8
        %v756 = vpop.permute.xlu0 %755
        %757 = vrot.lane.b32.xlu0 %v734, 8
        %v758 = vpop.permute.xlu0 %757
        %v767 = vmax.bf16 %v647, %v744
        %v768 = vmax.bf16 %v648, %v746
        %v769 = vmax.bf16 %v649, %v748
        %v770 = vmax.bf16 %v650, %v750
        %v771 = vmax.bf16 %v651, %v752
        %v772 = vmax.bf16 %v652, %v754
        %v773 = vmax.bf16 %v653, %v756
        %v774 = vmax.bf16 %v654, %v758
        %v775 = vshra.s32 %v415, 3
        %v776 = vshra.s32 %v416, 3
        %v777 = vshra.s32 %v417, 3
        %v778 = vshra.s32 %v418, 3
        %v779 = vshra.s32 %v419, 3
        %v780 = vshra.s32 %v420, 3
        %v781 = vshra.s32 %v421, 3
        %v782 = vshra.s32 %v422, 3
        %v783 = vand.u32 %v775, 1
        %v784 = vand.u32 %v776, 1
        %v785 = vand.u32 %v777, 1
        %v786 = vand.u32 %v778, 1
        %v787 = vand.u32 %v779, 1
        %v788 = vand.u32 %v780, 1
        %v789 = vand.u32 %v781, 1
        %v790 = vand.u32 %v782, 1
        %vm791 = vcmp.gt.s32.totalorder %v783, 0
        %vm792 = vcmp.gt.s32.totalorder %v784, 0
        %vm793 = vcmp.gt.s32.totalorder %v785, 0
        %vm794 = vcmp.gt.s32.totalorder %v786, 0
        %vm795 = vcmp.gt.s32.totalorder %v787, 0
        %vm796 = vcmp.gt.s32.totalorder %v788, 0
        %vm797 = vcmp.gt.s32.totalorder %v789, 0
        %vm798 = vcmp.gt.s32.totalorder %v790, 0
        %v799 = vsel %vm791, 1, 0
        %v800 = vsel %vm792, 1, 0
        %v801 = vsel %vm793, 1, 0
        %v802 = vsel %vm794, 1, 0
        %v803 = vsel %vm795, 1, 0
        %v804 = vsel %vm796, 1, 0
        %v805 = vsel %vm797, 1, 0
        %v806 = vsel %vm798, 1, 0
        %807 = vset.pattern.permute.xlu0 0
        %808 = vperm.xlu0 %807, %v799
        %v809 = vpop.permute.xlu0 %808
        %810 = vset.pattern.permute.xlu0 0
        %811 = vperm.xlu0 %810, %v800
        %v812 = vpop.permute.xlu0 %811
        %813 = vset.pattern.permute.xlu0 0
        %814 = vperm.xlu0 %813, %v801
        %v815 = vpop.permute.xlu0 %814
        %816 = vset.pattern.permute.xlu0 0
        %817 = vperm.xlu0 %816, %v802
        %v818 = vpop.permute.xlu0 %817
        %819 = vset.pattern.permute.xlu0 0
        %820 = vperm.xlu0 %819, %v803
        %v821 = vpop.permute.xlu0 %820
        %822 = vset.pattern.permute.xlu0 0
        %823 = vperm.xlu0 %822, %v804
        %v824 = vpop.permute.xlu0 %823
        %825 = vset.pattern.permute.xlu0 0
        %826 = vperm.xlu0 %825, %v805
        %v827 = vpop.permute.xlu0 %826
        %828 = vset.pattern.permute.xlu0 0
        %829 = vperm.xlu0 %828, %v806
        %v830 = vpop.permute.xlu0 %829
        %vm831 = vcmp.eq.s32.totalorder %v809, 1
        %vm832 = vcmp.eq.s32.totalorder %v812, 1
        %vm833 = vcmp.eq.s32.totalorder %v815, 1
        %vm834 = vcmp.eq.s32.totalorder %v818, 1
        %vm835 = vcmp.eq.s32.totalorder %v821, 1
        %vm836 = vcmp.eq.s32.totalorder %v824, 1
        %vm837 = vcmp.eq.s32.totalorder %v827, 1
        %vm838 = vcmp.eq.s32.totalorder %v830, 1
        %vm839 = vmpackc.low %vm831, %vm831
        %vm840 = vmpackc.low %vm832, %vm832
        %vm841 = vmpackc.low %vm833, %vm833
        %vm842 = vmpackc.low %vm834, %vm834
        %vm843 = vmpackc.low %vm835, %vm835
        %vm844 = vmpackc.low %vm836, %vm836
        %vm845 = vmpackc.low %vm837, %vm837
        %vm846 = vmpackc.low %vm838, %vm838
        %v847 = vsel %vm839, %v262, 4286644096
        %v848 = vsel %vm840, %v263, 4286644096
        %v849 = vsel %vm841, %v264, 4286644096
        %v850 = vsel %vm842, %v265, 4286644096
        %v851 = vsel %vm843, %v266, 4286644096
        %v852 = vsel %vm844, %v267, 4286644096
        %v853 = vsel %vm845, %v268, 4286644096
        %v854 = vsel %vm846, %v269, 4286644096
        %863 = vrot.lane.b32.xlu0 %v847, 4
        %v864 = vpop.permute.xlu0 %863
        %865 = vrot.lane.b32.xlu0 %v848, 4
        %v866 = vpop.permute.xlu0 %865
        %867 = vrot.lane.b32.xlu0 %v849, 4
        %v868 = vpop.permute.xlu0 %867
        %869 = vrot.lane.b32.xlu0 %v850, 4
        %v870 = vpop.permute.xlu0 %869
        %871 = vrot.lane.b32.xlu0 %v851, 4
        %v872 = vpop.permute.xlu0 %871
        %873 = vrot.lane.b32.xlu0 %v852, 4
        %v874 = vpop.permute.xlu0 %873
        %875 = vrot.lane.b32.xlu0 %v853, 4
        %v876 = vpop.permute.xlu0 %875
        %877 = vrot.lane.b32.xlu0 %v854, 4
        %v878 = vpop.permute.xlu0 %877
        %v887 = vmax.bf16 %v767, %v864
        %v888 = vmax.bf16 %v768, %v866
        %v889 = vmax.bf16 %v769, %v868
        %v890 = vmax.bf16 %v770, %v870
        %v891 = vmax.bf16 %v771, %v872
        %v892 = vmax.bf16 %v772, %v874
        %v893 = vmax.bf16 %v773, %v876
        %v894 = vmax.bf16 %v774, %v878
        %v895 = vshra.s32 %v415, 5
        %v896 = vshra.s32 %v416, 5
        %v897 = vshra.s32 %v417, 5
        %v898 = vshra.s32 %v418, 5
        %v899 = vshra.s32 %v419, 5
        %v900 = vshra.s32 %v420, 5
        %v901 = vshra.s32 %v421, 5
        %v902 = vshra.s32 %v422, 5
        %v903 = vand.u32 %v895, 1
        %v904 = vand.u32 %v896, 1
        %v905 = vand.u32 %v897, 1
        %v906 = vand.u32 %v898, 1
        %v907 = vand.u32 %v899, 1
        %v908 = vand.u32 %v900, 1
        %v909 = vand.u32 %v901, 1
        %v910 = vand.u32 %v902, 1
        %vm911 = vcmp.gt.s32.totalorder %v903, 0
        %vm912 = vcmp.gt.s32.totalorder %v904, 0
        %vm913 = vcmp.gt.s32.totalorder %v905, 0
        %vm914 = vcmp.gt.s32.totalorder %v906, 0
        %vm915 = vcmp.gt.s32.totalorder %v907, 0
        %vm916 = vcmp.gt.s32.totalorder %v908, 0
        %vm917 = vcmp.gt.s32.totalorder %v909, 0
        %vm918 = vcmp.gt.s32.totalorder %v910, 0
        %v919 = vsel %vm911, 1, 0
        %v920 = vsel %vm912, 1, 0
        %v921 = vsel %vm913, 1, 0
        %v922 = vsel %vm914, 1, 0
        %v923 = vsel %vm915, 1, 0
        %v924 = vsel %vm916, 1, 0
        %v925 = vsel %vm917, 1, 0
        %v926 = vsel %vm918, 1, 0
        %927 = vset.pattern.permute.xlu0 0
        %928 = vperm.xlu0 %927, %v919
        %v929 = vpop.permute.xlu0 %928
        %930 = vset.pattern.permute.xlu0 0
        %931 = vperm.xlu0 %930, %v920
        %v932 = vpop.permute.xlu0 %931
        %933 = vset.pattern.permute.xlu0 0
        %934 = vperm.xlu0 %933, %v921
        %v935 = vpop.permute.xlu0 %934
        %936 = vset.pattern.permute.xlu0 0
        %937 = vperm.xlu0 %936, %v922
        %v938 = vpop.permute.xlu0 %937
        %939 = vset.pattern.permute.xlu0 0
        %940 = vperm.xlu0 %939, %v923
        %v941 = vpop.permute.xlu0 %940
        %942 = vset.pattern.permute.xlu0 0
        %943 = vperm.xlu0 %942, %v924
        %v944 = vpop.permute.xlu0 %943
        %945 = vset.pattern.permute.xlu0 0
        %946 = vperm.xlu0 %945, %v925
        %v947 = vpop.permute.xlu0 %946
        %948 = vset.pattern.permute.xlu0 0
        %949 = vperm.xlu0 %948, %v926
        %v950 = vpop.permute.xlu0 %949
        %vm951 = vcmp.eq.s32.totalorder %v929, 1
        %vm952 = vcmp.eq.s32.totalorder %v932, 1
        %vm953 = vcmp.eq.s32.totalorder %v935, 1
        %vm954 = vcmp.eq.s32.totalorder %v938, 1
        %vm955 = vcmp.eq.s32.totalorder %v941, 1
        %vm956 = vcmp.eq.s32.totalorder %v944, 1
        %vm957 = vcmp.eq.s32.totalorder %v947, 1
        %vm958 = vcmp.eq.s32.totalorder %v950, 1
        %vm959 = vmpackc.low %vm951, %vm951
        %vm960 = vmpackc.low %vm952, %vm952
        %vm961 = vmpackc.low %vm953, %vm953
        %vm962 = vmpackc.low %vm954, %vm954
        %vm963 = vmpackc.low %vm955, %vm955
        %vm964 = vmpackc.low %vm956, %vm956
        %vm965 = vmpackc.low %vm957, %vm957
        %vm966 = vmpackc.low %vm958, %vm958
        %v967 = vsel %vm959, %v262, 4286644096
        %v968 = vsel %vm960, %v263, 4286644096
        %v969 = vsel %vm961, %v264, 4286644096
        %v970 = vsel %vm962, %v265, 4286644096
        %v971 = vsel %vm963, %v266, 4286644096
        %v972 = vsel %vm964, %v267, 4286644096
        %v973 = vsel %vm965, %v268, 4286644096
        %v974 = vsel %vm966, %v269, 4286644096
        %983 = vrot.lane.b32.xlu0 %v967, 124
        %v984 = vpop.permute.xlu0 %983
        %985 = vrot.lane.b32.xlu0 %v968, 124
        %v986 = vpop.permute.xlu0 %985
        %987 = vrot.lane.b32.xlu0 %v969, 124
        %v988 = vpop.permute.xlu0 %987
        %989 = vrot.lane.b32.xlu0 %v970, 124
        %v990 = vpop.permute.xlu0 %989
        %991 = vrot.lane.b32.xlu0 %v971, 124
        %v992 = vpop.permute.xlu0 %991
        %993 = vrot.lane.b32.xlu0 %v972, 124
        %v994 = vpop.permute.xlu0 %993
        %995 = vrot.lane.b32.xlu0 %v973, 124
        %v996 = vpop.permute.xlu0 %995
        %997 = vrot.lane.b32.xlu0 %v974, 124
        %v998 = vpop.permute.xlu0 %997
        %v1007 = vmax.bf16 %v887, %v984
        %v1008 = vmax.bf16 %v888, %v986
        %v1009 = vmax.bf16 %v889, %v988
        %v1010 = vmax.bf16 %v890, %v990
        %v1011 = vmax.bf16 %v891, %v992
        %v1012 = vmax.bf16 %v892, %v994
        %v1013 = vmax.bf16 %v893, %v996
        %v1014 = vmax.bf16 %v894, %v998
        %v1015 = vshra.s32 %v415, 6
        %v1016 = vshra.s32 %v416, 6
        %v1017 = vshra.s32 %v417, 6
        %v1018 = vshra.s32 %v418, 6
        %v1019 = vshra.s32 %v419, 6
        %v1020 = vshra.s32 %v420, 6
        %v1021 = vshra.s32 %v421, 6
        %v1022 = vshra.s32 %v422, 6
        %v1023 = vand.u32 %v1015, 1
        %v1024 = vand.u32 %v1016, 1
        %v1025 = vand.u32 %v1017, 1
        %v1026 = vand.u32 %v1018, 1
        %v1027 = vand.u32 %v1019, 1
        %v1028 = vand.u32 %v1020, 1
        %v1029 = vand.u32 %v1021, 1
        %v1030 = vand.u32 %v1022, 1
        %vm1031 = vcmp.gt.s32.totalorder %v1023, 0
        %vm1032 = vcmp.gt.s32.totalorder %v1024, 0
        %vm1033 = vcmp.gt.s32.totalorder %v1025, 0
        %vm1034 = vcmp.gt.s32.totalorder %v1026, 0
        %vm1035 = vcmp.gt.s32.totalorder %v1027, 0
        %vm1036 = vcmp.gt.s32.totalorder %v1028, 0
        %vm1037 = vcmp.gt.s32.totalorder %v1029, 0
        %vm1038 = vcmp.gt.s32.totalorder %v1030, 0
        %v1039 = vsel %vm1031, 1, 0
        %v1040 = vsel %vm1032, 1, 0
        %v1041 = vsel %vm1033, 1, 0
        %v1042 = vsel %vm1034, 1, 0
        %v1043 = vsel %vm1035, 1, 0
        %v1044 = vsel %vm1036, 1, 0
        %v1045 = vsel %vm1037, 1, 0
        %v1046 = vsel %vm1038, 1, 0
        %1047 = vset.pattern.permute.xlu0 0
        %1048 = vperm.xlu0 %1047, %v1039
        %v1049 = vpop.permute.xlu0 %1048
        %1050 = vset.pattern.permute.xlu0 0
        %1051 = vperm.xlu0 %1050, %v1040
        %v1052 = vpop.permute.xlu0 %1051
        %1053 = vset.pattern.permute.xlu0 0
        %1054 = vperm.xlu0 %1053, %v1041
        %v1055 = vpop.permute.xlu0 %1054
        %1056 = vset.pattern.permute.xlu0 0
        %1057 = vperm.xlu0 %1056, %v1042
        %v1058 = vpop.permute.xlu0 %1057
        %1059 = vset.pattern.permute.xlu0 0
        %1060 = vperm.xlu0 %1059, %v1043
        %v1061 = vpop.permute.xlu0 %1060
        %1062 = vset.pattern.permute.xlu0 0
        %1063 = vperm.xlu0 %1062, %v1044
        %v1064 = vpop.permute.xlu0 %1063
        %1065 = vset.pattern.permute.xlu0 0
        %1066 = vperm.xlu0 %1065, %v1045
        %v1067 = vpop.permute.xlu0 %1066
        %1068 = vset.pattern.permute.xlu0 0
        %1069 = vperm.xlu0 %1068, %v1046
        %v1070 = vpop.permute.xlu0 %1069
        %vm1071 = vcmp.eq.s32.totalorder %v1049, 1
        %vm1072 = vcmp.eq.s32.totalorder %v1052, 1
        %vm1073 = vcmp.eq.s32.totalorder %v1055, 1
        %vm1074 = vcmp.eq.s32.totalorder %v1058, 1
        %vm1075 = vcmp.eq.s32.totalorder %v1061, 1
        %vm1076 = vcmp.eq.s32.totalorder %v1064, 1
        %vm1077 = vcmp.eq.s32.totalorder %v1067, 1
        %vm1078 = vcmp.eq.s32.totalorder %v1070, 1
        %vm1079 = vmpackc.low %vm1071, %vm1071
        %vm1080 = vmpackc.low %vm1072, %vm1072
        %vm1081 = vmpackc.low %vm1073, %vm1073
        %vm1082 = vmpackc.low %vm1074, %vm1074
        %vm1083 = vmpackc.low %vm1075, %vm1075
        %vm1084 = vmpackc.low %vm1076, %vm1076
        %vm1085 = vmpackc.low %vm1077, %vm1077
        %vm1086 = vmpackc.low %vm1078, %vm1078
        %v1087 = vsel %vm1079, %v262, 4286644096
        %v1088 = vsel %vm1080, %v263, 4286644096
        %v1089 = vsel %vm1081, %v264, 4286644096
        %v1090 = vsel %vm1082, %v265, 4286644096
        %v1091 = vsel %vm1083, %v266, 4286644096
        %v1092 = vsel %vm1084, %v267, 4286644096
        %v1093 = vsel %vm1085, %v268, 4286644096
        %v1094 = vsel %vm1086, %v269, 4286644096
        %1103 = vrot.lane.b32.xlu0 %v1087, 120
        %v1104 = vpop.permute.xlu0 %1103
        %1105 = vrot.lane.b32.xlu0 %v1088, 120
        %v1106 = vpop.permute.xlu0 %1105
        %1107 = vrot.lane.b32.xlu0 %v1089, 120
        %v1108 = vpop.permute.xlu0 %1107
        %1109 = vrot.lane.b32.xlu0 %v1090, 120
        %v1110 = vpop.permute.xlu0 %1109
        %1111 = vrot.lane.b32.xlu0 %v1091, 120
        %v1112 = vpop.permute.xlu0 %1111
        %1113 = vrot.lane.b32.xlu0 %v1092, 120
        %v1114 = vpop.permute.xlu0 %1113
        %1115 = vrot.lane.b32.xlu0 %v1093, 120
        %v1116 = vpop.permute.xlu0 %1115
        %1117 = vrot.lane.b32.xlu0 %v1094, 120
        %v1118 = vpop.permute.xlu0 %1117
        %v1127 = vmax.bf16 %v1007, %v1104
        %v1128 = vmax.bf16 %v1008, %v1106
        %v1129 = vmax.bf16 %v1009, %v1108
        %v1130 = vmax.bf16 %v1010, %v1110
        %v1131 = vmax.bf16 %v1011, %v1112
        %v1132 = vmax.bf16 %v1012, %v1114
        %v1133 = vmax.bf16 %v1013, %v1116
        %v1134 = vmax.bf16 %v1014, %v1118
        %v1135 = vshra.s32 %v415, 7
        %v1136 = vshra.s32 %v416, 7
        %v1137 = vshra.s32 %v417, 7
        %v1138 = vshra.s32 %v418, 7
        %v1139 = vshra.s32 %v419, 7
        %v1140 = vshra.s32 %v420, 7
        %v1141 = vshra.s32 %v421, 7
        %v1142 = vshra.s32 %v422, 7
        %v1143 = vand.u32 %v1135, 1
        %v1144 = vand.u32 %v1136, 1
        %v1145 = vand.u32 %v1137, 1
        %v1146 = vand.u32 %v1138, 1
        %v1147 = vand.u32 %v1139, 1
        %v1148 = vand.u32 %v1140, 1
        %v1149 = vand.u32 %v1141, 1
        %v1150 = vand.u32 %v1142, 1
        %vm1151 = vcmp.gt.s32.totalorder %v1143, 0
        %vm1152 = vcmp.gt.s32.totalorder %v1144, 0
        %vm1153 = vcmp.gt.s32.totalorder %v1145, 0
        %vm1154 = vcmp.gt.s32.totalorder %v1146, 0
        %vm1155 = vcmp.gt.s32.totalorder %v1147, 0
        %vm1156 = vcmp.gt.s32.totalorder %v1148, 0
        %vm1157 = vcmp.gt.s32.totalorder %v1149, 0
        %vm1158 = vcmp.gt.s32.totalorder %v1150, 0
        %v1159 = vsel %vm1151, 1, 0
        %v1160 = vsel %vm1152, 1, 0
        %v1161 = vsel %vm1153, 1, 0
        %v1162 = vsel %vm1154, 1, 0
        %v1163 = vsel %vm1155, 1, 0
        %v1164 = vsel %vm1156, 1, 0
        %v1165 = vsel %vm1157, 1, 0
        %v1166 = vsel %vm1158, 1, 0
        %1167 = vset.pattern.permute.xlu0 0
        %1168 = vperm.xlu0 %1167, %v1159
        %v1169 = vpop.permute.xlu0 %1168
        %1170 = vset.pattern.permute.xlu0 0
        %1171 = vperm.xlu0 %1170, %v1160
        %v1172 = vpop.permute.xlu0 %1171
        %1173 = vset.pattern.permute.xlu0 0
        %1174 = vperm.xlu0 %1173, %v1161
        %v1175 = vpop.permute.xlu0 %1174
        %1176 = vset.pattern.permute.xlu0 0
        %1177 = vperm.xlu0 %1176, %v1162
        %v1178 = vpop.permute.xlu0 %1177
        %1179 = vset.pattern.permute.xlu0 0
        %1180 = vperm.xlu0 %1179, %v1163
        %v1181 = vpop.permute.xlu0 %1180
        %1182 = vset.pattern.permute.xlu0 0
        %1183 = vperm.xlu0 %1182, %v1164
        %v1184 = vpop.permute.xlu0 %1183
        %1185 = vset.pattern.permute.xlu0 0
        %1186 = vperm.xlu0 %1185, %v1165
        %v1187 = vpop.permute.xlu0 %1186
        %1188 = vset.pattern.permute.xlu0 0
        %1189 = vperm.xlu0 %1188, %v1166
        %v1190 = vpop.permute.xlu0 %1189
        %vm1191 = vcmp.eq.s32.totalorder %v1169, 1
        %vm1192 = vcmp.eq.s32.totalorder %v1172, 1
        %vm1193 = vcmp.eq.s32.totalorder %v1175, 1
        %vm1194 = vcmp.eq.s32.totalorder %v1178, 1
        %vm1195 = vcmp.eq.s32.totalorder %v1181, 1
        %vm1196 = vcmp.eq.s32.totalorder %v1184, 1
        %vm1197 = vcmp.eq.s32.totalorder %v1187, 1
        %vm1198 = vcmp.eq.s32.totalorder %v1190, 1
        %vm1199 = vmpackc.low %vm1191, %vm1191
        %vm1200 = vmpackc.low %vm1192, %vm1192
        %vm1201 = vmpackc.low %vm1193, %vm1193
        %vm1202 = vmpackc.low %vm1194, %vm1194
        %vm1203 = vmpackc.low %vm1195, %vm1195
        %vm1204 = vmpackc.low %vm1196, %vm1196
        %vm1205 = vmpackc.low %vm1197, %vm1197
        %vm1206 = vmpackc.low %vm1198, %vm1198
        %v1207 = vsel %vm1199, %v262, 4286644096
        %v1208 = vsel %vm1200, %v263, 4286644096
        %v1209 = vsel %vm1201, %v264, 4286644096
        %v1210 = vsel %vm1202, %v265, 4286644096
        %v1211 = vsel %vm1203, %v266, 4286644096
        %v1212 = vsel %vm1204, %v267, 4286644096
        %v1213 = vsel %vm1205, %v268, 4286644096
        %v1214 = vsel %vm1206, %v269, 4286644096
        %1223 = vrot.lane.b32.xlu0 %v1207, 116
        %v1224 = vpop.permute.xlu0 %1223
        %1225 = vrot.lane.b32.xlu0 %v1208, 116
        %v1226 = vpop.permute.xlu0 %1225
        %1227 = vrot.lane.b32.xlu0 %v1209, 116
        %v1228 = vpop.permute.xlu0 %1227
        %1229 = vrot.lane.b32.xlu0 %v1210, 116
        %v1230 = vpop.permute.xlu0 %1229
        %1231 = vrot.lane.b32.xlu0 %v1211, 116
        %v1232 = vpop.permute.xlu0 %1231
        %1233 = vrot.lane.b32.xlu0 %v1212, 116
        %v1234 = vpop.permute.xlu0 %1233
        %1235 = vrot.lane.b32.xlu0 %v1213, 116
        %v1236 = vpop.permute.xlu0 %1235
        %1237 = vrot.lane.b32.xlu0 %v1214, 116
        %v1238 = vpop.permute.xlu0 %1237
        %v1247 = vmax.bf16 %v1127, %v1224
        %v1248 = vmax.bf16 %v1128, %v1226
        %v1249 = vmax.bf16 %v1129, %v1228
        %v1250 = vmax.bf16 %v1130, %v1230
        %v1251 = vmax.bf16 %v1131, %v1232
        %v1252 = vmax.bf16 %v1132, %v1234
        %v1253 = vmax.bf16 %v1133, %v1236
        %v1254 = vmax.bf16 %v1134, %v1238
        %v1255 = vshra.s32 %v415, 8
        %v1256 = vshra.s32 %v416, 8
        %v1257 = vshra.s32 %v417, 8
        %v1258 = vshra.s32 %v418, 8
        %v1259 = vshra.s32 %v419, 8
        %v1260 = vshra.s32 %v420, 8
        %v1261 = vshra.s32 %v421, 8
        %v1262 = vshra.s32 %v422, 8
        %v1263 = vand.u32 %v1255, 1
        %v1264 = vand.u32 %v1256, 1
        %v1265 = vand.u32 %v1257, 1
        %v1266 = vand.u32 %v1258, 1
        %v1267 = vand.u32 %v1259, 1
        %v1268 = vand.u32 %v1260, 1
        %v1269 = vand.u32 %v1261, 1
        %v1270 = vand.u32 %v1262, 1
        %vm1271 = vcmp.gt.s32.totalorder %v1263, 0
        %vm1272 = vcmp.gt.s32.totalorder %v1264, 0
        %vm1273 = vcmp.gt.s32.totalorder %v1265, 0
        %vm1274 = vcmp.gt.s32.totalorder %v1266, 0
        %vm1275 = vcmp.gt.s32.totalorder %v1267, 0
        %vm1276 = vcmp.gt.s32.totalorder %v1268, 0
        %vm1277 = vcmp.gt.s32.totalorder %v1269, 0
        %vm1278 = vcmp.gt.s32.totalorder %v1270, 0
        %v1279 = vsel %vm1271, 1, 0
        %v1280 = vsel %vm1272, 1, 0
        %v1281 = vsel %vm1273, 1, 0
        %v1282 = vsel %vm1274, 1, 0
        %v1283 = vsel %vm1275, 1, 0
        %v1284 = vsel %vm1276, 1, 0
        %v1285 = vsel %vm1277, 1, 0
        %v1286 = vsel %vm1278, 1, 0
        %1287 = vset.pattern.permute.xlu0 0
        %1288 = vperm.xlu0 %1287, %v1279
        %v1289 = vpop.permute.xlu0 %1288
        %1290 = vset.pattern.permute.xlu0 0
        %1291 = vperm.xlu0 %1290, %v1280
        %v1292 = vpop.permute.xlu0 %1291
        %1293 = vset.pattern.permute.xlu0 0
        %1294 = vperm.xlu0 %1293, %v1281
        %v1295 = vpop.permute.xlu0 %1294
        %1296 = vset.pattern.permute.xlu0 0
        %1297 = vperm.xlu0 %1296, %v1282
        %v1298 = vpop.permute.xlu0 %1297
        %1299 = vset.pattern.permute.xlu0 0
        %1300 = vperm.xlu0 %1299, %v1283
        %v1301 = vpop.permute.xlu0 %1300
        %1302 = vset.pattern.permute.xlu0 0
        %1303 = vperm.xlu0 %1302, %v1284
        %v1304 = vpop.permute.xlu0 %1303
        %1305 = vset.pattern.permute.xlu0 0
        %1306 = vperm.xlu0 %1305, %v1285
        %v1307 = vpop.permute.xlu0 %1306
        %1308 = vset.pattern.permute.xlu0 0
        %1309 = vperm.xlu0 %1308, %v1286
        %v1310 = vpop.permute.xlu0 %1309
        %vm1311 = vcmp.eq.s32.totalorder %v1289, 1
        %vm1312 = vcmp.eq.s32.totalorder %v1292, 1
        %vm1313 = vcmp.eq.s32.totalorder %v1295, 1
        %vm1314 = vcmp.eq.s32.totalorder %v1298, 1
        %vm1315 = vcmp.eq.s32.totalorder %v1301, 1
        %vm1316 = vcmp.eq.s32.totalorder %v1304, 1
        %vm1317 = vcmp.eq.s32.totalorder %v1307, 1
        %vm1318 = vcmp.eq.s32.totalorder %v1310, 1
        %vm1319 = vmpackc.low %vm1311, %vm1311
        %vm1320 = vmpackc.low %vm1312, %vm1312
        %vm1321 = vmpackc.low %vm1313, %vm1313
        %vm1322 = vmpackc.low %vm1314, %vm1314
        %vm1323 = vmpackc.low %vm1315, %vm1315
        %vm1324 = vmpackc.low %vm1316, %vm1316
        %vm1325 = vmpackc.low %vm1317, %vm1317
        %vm1326 = vmpackc.low %vm1318, %vm1318
        %v1327 = vsel %vm1319, %v262, 4286644096
        %v1328 = vsel %vm1320, %v263, 4286644096
        %v1329 = vsel %vm1321, %v264, 4286644096
        %v1330 = vsel %vm1322, %v265, 4286644096
        %v1331 = vsel %vm1323, %v266, 4286644096
        %v1332 = vsel %vm1324, %v267, 4286644096
        %v1333 = vsel %vm1325, %v268, 4286644096
        %v1334 = vsel %vm1326, %v269, 4286644096
        %1343 = vrot.lane.b32.xlu0 %v1327, 112
        %v1344 = vpop.permute.xlu0 %1343
        %1345 = vrot.lane.b32.xlu0 %v1328, 112
        %v1346 = vpop.permute.xlu0 %1345
        %1347 = vrot.lane.b32.xlu0 %v1329, 112
        %v1348 = vpop.permute.xlu0 %1347
        %1349 = vrot.lane.b32.xlu0 %v1330, 112
        %v1350 = vpop.permute.xlu0 %1349
        %1351 = vrot.lane.b32.xlu0 %v1331, 112
        %v1352 = vpop.permute.xlu0 %1351
        %1353 = vrot.lane.b32.xlu0 %v1332, 112
        %v1354 = vpop.permute.xlu0 %1353
        %1355 = vrot.lane.b32.xlu0 %v1333, 112
        %v1356 = vpop.permute.xlu0 %1355
        %1357 = vrot.lane.b32.xlu0 %v1334, 112
        %v1358 = vpop.permute.xlu0 %1357
        %v1367 = vmax.bf16 %v1247, %v1344
        %v1368 = vmax.bf16 %v1248, %v1346
        %v1369 = vmax.bf16 %v1249, %v1348
        %v1370 = vmax.bf16 %v1250, %v1350
        %v1371 = vmax.bf16 %v1251, %v1352
        %v1372 = vmax.bf16 %v1252, %v1354
        %v1373 = vmax.bf16 %v1253, %v1356
        %v1374 = vmax.bf16 %v1254, %v1358
        %v1375 = vunpack.c.l.bf16 %v1367
        %v1376 = vunpack.c.l.bf16 %v1368
        %v1377 = vunpack.c.l.bf16 %v1369
        %v1378 = vunpack.c.l.bf16 %v1370
        %v1379 = vunpack.c.l.bf16 %v1371
        %v1380 = vunpack.c.l.bf16 %v1372
        %v1381 = vunpack.c.l.bf16 %v1373
        %v1382 = vunpack.c.l.bf16 %v1374
        %1391 = vrot.lane.b32.xlu0 %v1375, 112
        %v1392 = vpop.permute.xlu0 %1391
        %1393 = vrot.lane.b32.xlu0 %v1376, 112
        %v1394 = vpop.permute.xlu0 %1393
        %1395 = vrot.lane.b32.xlu0 %v1377, 112
        %v1396 = vpop.permute.xlu0 %1395
        %1397 = vrot.lane.b32.xlu0 %v1378, 112
        %v1398 = vpop.permute.xlu0 %1397
        %1399 = vrot.lane.b32.xlu0 %v1379, 112
        %v1400 = vpop.permute.xlu0 %1399
        %1401 = vrot.lane.b32.xlu0 %v1380, 112
        %v1402 = vpop.permute.xlu0 %1401
        %1403 = vrot.lane.b32.xlu0 %v1381, 112
        %v1404 = vpop.permute.xlu0 %1403
        %1405 = vrot.lane.b32.xlu0 %v1382, 112
        %v1406 = vpop.permute.xlu0 %1405
        %vm1415 = vcmask 31744
        %v1416 = vsel %vm1415, %v1392, 0.0
        %v1417 = vsel %vm1415, %v1394, 0.0
        %v1418 = vsel %vm1415, %v1396, 0.0
        %v1419 = vsel %vm1415, %v1398, 0.0
        %v1420 = vsel %vm1415, %v1400, 0.0
        %v1421 = vsel %vm1415, %v1402, 0.0
        %v1422 = vsel %vm1415, %v1404, 0.0
        %v1423 = vsel %vm1415, %v1406, 0.0
        %1424 = vst [vmem:[%s245] sm:$0xff] %v1416
        %1425 = vst [vmem:[%s245 + $0x8] sm:$0xff] %v1417
        %1426 = vst [vmem:[%s245 + $0x10] sm:$0xff] %v1418
        %1427 = vst [vmem:[%s245 + $0x18] sm:$0xff] %v1419
        %1428 = vst [vmem:[%s245 + $0x20] sm:$0xff] %v1420
        %1429 = vst [vmem:[%s245 + $0x28] sm:$0xff] %v1421
        %1430 = vst [vmem:[%s245 + $0x30] sm:$0xff] %v1422
        %1431 = vst [vmem:[%s245 + $0x38] sm:$0xff] %v1423
        %s1432 = sand.u32 %s125, 1
        %s1433 = scalar_lea.sflag [#allocation3], %s1432
        %s1434 = sand.u32 %s125, 1
        %s1435 = smul.addr %s1434, 64
        %s1436 = scalar_lea.vmem [#allocation2], %s1435
        %s1437 = sand.u32 %s151, 1
        %s1438 = scalar_lea.sflag [#allocation5], %s1437
        %s1439 = sand.u32 %s151, 1
        %s1440 = smul.addr %s1439, 64
        %s1441 = scalar_lea.vmem [#allocation4], %s1440
        // Predicated region
        $region37: #{tpu_custom_call.1} parent=35 // pred_check
          %p1442 = pneg %p135
        $region38: #{tpu_custom_call.1} parent=35 // pred_check_branch
          %1444 = sbr.rel (%p1442) target = $region40
        $region39: #{tpu_custom_call.1} parent=35 // pred_region
          %s1445 = smul.u32 8, %s23
          %s1447 = ssub.s32 1024, 1024
          %1448 = vsyncadd %s1433, %s1447
          %s1449 = smul.addr %s1445, 128
          %s1450 = scalar_lea.hbm %s4, %s1449
          %s1451 = sshll.u32 %s1436, 4
          %s1452 = int_to_ptr.vmem [resolvable:$true] %s1451
          %1457 = dma.vmem_to_hbm [thread:$0]  %s1452, 1024, %s1450, %s1433, 128, 128, 8
        $region40: #{tpu_custom_call.1} parent=35 // pred_fallthru
          _
        // Predicated region
        $region41: #{tpu_custom_call.1} parent=35 // pred_check
          %p1458 = pneg %p161
        $region42: #{tpu_custom_call.1} parent=35 // pred_check_branch
          %1460 = sbr.rel (%p1458) target = $region44
        $region43: #{tpu_custom_call.1} parent=35 // pred_region
          %s1461 = smul.u32 8, %s23
          %s1463 = ssub.s32 1024, 1024
          %1464 = vsyncadd %s1438, %s1463
          %s1465 = smul.addr %s1461, 128
          %s1466 = scalar_lea.hbm %s5, %s1465
          %s1467 = sshll.u32 %s1441, 4
          %s1468 = int_to_ptr.vmem [resolvable:$true] %s1467
          %1473 = dma.vmem_to_hbm [thread:$0]  %s1468, 1024, %s1466, %s1438, 128, 128, 8
        $region44: #{tpu_custom_call.1} parent=35 // pred_fallthru
          _
      $region36: #{tpu_custom_call.1} parent=5 // pred_fallthru
        _
      %p1474 = scmp.le.s32.totalorder 2, %s18
      // Predicated region
      $region45: #{tpu_custom_call.1} parent=5 // pred_check
        %p1475 = pneg %p1474
      $region46: #{tpu_custom_call.1} parent=5 // pred_check_branch
        %1477 = sbr.rel (%p1475) target = $region48
      $region47: #{tpu_custom_call.1} parent=5 // pred_region
        %s1478 = ssub.s32 %s18, 2
        // Predicated region
        $region49: #{tpu_custom_call.1} parent=47 // pred_check
          %p1479 = pneg %p141
        $region50: #{tpu_custom_call.1} parent=47 // pred_check_branch
          %1481 = sbr.rel (%p1479) target = $region52
        $region51: #{tpu_custom_call.1} parent=47 // pred_region
          %s1482 = sand.u32 %s126, 1
          %s1483 = scalar_lea.sflag [#allocation3], %s1482
          %s1484 = sand.u32 %s126, 1
          %s1485 = smul.addr %s1484, 64
          %s1486 = scalar_lea.vmem [#allocation2], %s1485
          %1487 = dma.done %s1483, 1024
        $region52: #{tpu_custom_call.1} parent=47 // pred_fallthru
          _
        // Predicated region
        $region53: #{tpu_custom_call.1} parent=47 // pred_check
          %p1488 = pneg %p167
        $region54: #{tpu_custom_call.1} parent=47 // pred_check_branch
          %1490 = sbr.rel (%p1488) target = $region56
        $region55: #{tpu_custom_call.1} parent=47 // pred_region
          %s1491 = sand.u32 %s152, 1
          %s1492 = scalar_lea.sflag [#allocation5], %s1491
          %s1493 = sand.u32 %s152, 1
          %s1494 = smul.addr %s1493, 64
          %s1495 = scalar_lea.vmem [#allocation4], %s1494
          %1496 = dma.done %s1492, 1024
        $region56: #{tpu_custom_call.1} parent=47 // pred_fallthru
          _
      $region48: #{tpu_custom_call.1} parent=5 // pred_fallthru
        _
    $region6: #{tpu_custom_call.1} parent=1 // loop_footer
      %s22 = sadd.s32 1, %s18
    $region7: #{tpu_custom_call.1} parent=1 // loop_footer_branch
      %17 = sbr.rel target = $region3
    $region8: #{tpu_custom_call.1} parent=1 // loop_exit
      _
    %1497 = vsyncpa [#allocation3], 1
    %s1498 = scalar_lea.sflag [#allocation3], 1
    %1499 = vsyncpa %s1498, 1
    %1500 = vsyncpa [#allocation5], 1
    %s1501 = scalar_lea.sflag [#allocation5], 1
    %1502 = vsyncpa %s1501, 1

</llo_original>
